<compile_context>
chip_gen: v5e
topology: v5e:2x2
jax: 0.10.0
libtpu: 0.0.40
codegen_flags: <defaults>
</compile_context>

<pallas_src>
import functools

import numpy as np
import jax
import jax.numpy as jnp
from jax import lax
from jax.experimental import pallas as pl
from jax.experimental.pallas import tpu as pltpu


def _pick_chunk(S, N, K, D):
    """Largest chunk c (<= 8, dividing K) whose stacked bf16 hit temp stays
    <= ~4 MiB, preferring c*D to be a multiple of 128 (lane-aligned stores)."""
    cap = 8
    while cap > 1 and cap * S * N * 2 > 4 * 1024 * 1024:
        cap //= 2
    cap = max(1, min(cap, K))
    best = 1
    for c in range(1, cap + 1):
        if K % c == 0 and (c * D) % 128 == 0:
            best = c
    if best == 1:
        for c in range(1, cap + 1):
            if K % c == 0:
                best = c
    return best


def _local_grouper_kernel(xyz_ref, xyz_t_ref, pts_ref,
                          new_xyz_ref, grouped_ref,
                          sqrd_ref, *, S, K, N, D, R, L, CK, radius):
    f32 = jnp.float32
    bf16 = jnp.bfloat16

    # Flattened point index of each (sublane, lane) slot of the (R, L) layout.
    idx2d = (lax.broadcasted_iota(jnp.int32, (R, L), 0) * L
             + lax.broadcasted_iota(jnp.int32, (R, L), 1))

    px = xyz_t_ref[0, 0]                                     # [R, L]
    py = xyz_t_ref[0, 1]
    pz = xyz_t_ref[0, 2]

    # ---------------- furthest point sampling (serial, latency-bound) --------
    # dists lives in the (R, L) full-vreg layout, so the VPU ops and the two
    # XLU reduces on the serial recurrence touch N/1024 vregs, not N/128.
    def fps_body(i, carry):
        far, dists = carry                                   # i32, [R, L] f32
        c = xyz_ref[0, pl.ds(far, 1), :]                     # [1, 3] dyn. fetch
        new_xyz_ref[0, pl.ds(i, 1), :] = c                   # off the recurrence
        cx = c[:, 0:1]
        cy = c[:, 1:2]
        cz = c[:, 2:3]
        d = (px - cx) ** 2 + (py - cy) ** 2 + (pz - cz) ** 2  # [R, L]
        # Stash the ball-query row in native (R, L) layout: full-lane stores,
        # no relayout inside the serial loop (all off the far_new chain).
        for r in range(R):
            sqrd_ref[r, pl.ds(i, 1), :] = d[r:r + 1, :]
        dists = jnp.minimum(dists, d)
        m = jnp.max(dists)
        # first (lowest) index among maxima, matching argmax tie-breaking
        far_new = jnp.min(jnp.where(dists == m, idx2d, N)).astype(jnp.int32)
        return far_new, dists

    init = (jnp.int32(0), jnp.full((R, L), 1e10, dtype=f32))
    lax.fori_loop(0, S, fps_body, init)

    # ---------------- ball query ---------------------------------------------
    # Reassemble the [S, N] squared-distance matrix with one bulk lane concat
    # (point n = r*L + l), out of the latency-bound section.
    sqrd = jnp.concatenate([sqrd_ref[r] for r in range(R)], axis=-1)  # [S, N]
    in_r = sqrd <= (radius * radius)                                   # [S, N]

    # Upper-triangular prefix matrix, generated in-kernel (cheap, and safe
    # under megacore sharding of the batch grid axis).
    ridx = lax.broadcasted_iota(jnp.int32, (N, 1), 0)
    cidx = lax.broadcasted_iota(jnp.int32, (1, N), 1)
    tri = (ridx <= cidx).astype(bf16)                                  # [N, N]

    # Inclusive prefix count of in-radius points via one bf16 MXU matmul.
    # Exactness guard: in_r/tri are exact 0/1 bf16 values, accumulation is f32
    # and counts <= N << 2^24; weighted masks or huge N would break this.
    rank = jnp.dot(in_r.astype(bf16), tri, preferred_element_type=f32)  # [S, N]
    count = rank[:, N - 1:N]                                            # [S, 1]
    # order[s, n] = 1-based in-radius order of point n for query s, else 0.
    order = jnp.where(in_r, rank, 0.0)                                  # [S, N]

    pts = pts_ref[0]                                                    # [N, D]
    # hi/lo bf16 split: both gather matmuls run as bf16 MXU passes with f32
    # accumulation while keeping ~f32 accuracy (hit rows are exact one-hot,
    # so each gathered value is hi[n] + lo[n]).
    pts_hi = pts.astype(bf16)
    pts_lo = (pts - pts_hi.astype(f32)).astype(bf16)

    # k-th neighbor of query s = point whose in-radius order is k+1; if fewer
    # than k+1 points are in radius, pad with the first in-radius point
    # (order 1) — exactly the torch sort + group_first semantics.  K is
    # processed in chunks of CK: the stationary pts operand is pushed to the
    # MXU once per chunk and the writeback is one CK*D-wide aligned store.
    for k0 in range(0, K, CK):
        c = min(CK, K - k0)
        hits = []
        for kk in range(c):
            t = float(k0 + kk + 1)
            tk = jnp.where(count >= t, t, 1.0)                  # [S, 1]
            hits.append((order == tk).astype(bf16))             # [S, N] one-hot
        hit2d = jnp.concatenate(hits, axis=0)                   # [c*S, N] k-major
        g = (jnp.dot(hit2d, pts_hi, preferred_element_type=f32)
             + jnp.dot(hit2d, pts_lo, preferred_element_type=f32))   # [c*S, D]
        slab = jnp.concatenate(
            [g[kk * S:(kk + 1) * S, :] for kk in range(c)], axis=-1)  # [S, c*D]
        grouped_ref[0, :, k0 * D:(k0 + c) * D] = slab.astype(grouped_ref.dtype)


def local_grouper(xyz, points, samples, kneighbors, radius=0.5):
    B, N, C = xyz.shape
    assert C == 3
    D = points.shape[-1]
    S, K = samples, kneighbors
    xyz = xyz.astype(jnp.float32)
    points = points.astype(jnp.float32)

    # (R, L) factorization of the point axis so FPS works on full vregs.
    L = 128 if N % 128 == 0 else N
    R = N // L
    xyz_t = jnp.transpose(xyz, (0, 2, 1)).reshape(B, 3, R, L)

    CK = _pick_chunk(S, N, K, D)

    kernel = functools.partial(_local_grouper_kernel, S=S, K=K, N=N, D=D,
                               R=R, L=L, CK=CK, radius=float(radius))
    out_shapes = (jax.ShapeDtypeStruct((B, S, 3), jnp.float32),
                  jax.ShapeDtypeStruct((B, S, K * D), jnp.float32))
    new_xyz, grouped = pl.pallas_call(
        kernel,
        out_shape=out_shapes,
        grid_spec=pltpu.PrefetchScalarGridSpec(
            num_scalar_prefetch=0,
            grid=(B,),
            in_specs=[pl.BlockSpec((1, N, 3), lambda b: (b, 0, 0)),      # xyz
                      pl.BlockSpec((1, 3, R, L), lambda b: (b, 0, 0, 0)),  # xyz_t
                      pl.BlockSpec((1, N, D), lambda b: (b, 0, 0))],     # points
            out_specs=[pl.BlockSpec((1, S, 3), lambda b: (b, 0, 0)),
                       pl.BlockSpec((1, S, K * D), lambda b: (b, 0, 0))],
            scratch_shapes=[pltpu.VMEM((R, S, L), jnp.float32)]),        # sqrd rows
        compiler_params=pltpu.CompilerParams(
            dimension_semantics=("parallel",),
            vmem_limit_bytes=48 * 1024 * 1024),
    )(xyz, xyz_t, points)
    return new_xyz, grouped.reshape(B, S, K, D)   # free reshape (contiguous)


def _reference(xyz, points, S, K, radius):
    """Pure numpy reference mirroring the PyTorch semantics."""
    xyz = np.asarray(xyz, dtype=np.float32)
    points = np.asarray(points, dtype=np.float32)
    B, N, _ = xyz.shape
    D = points.shape[-1]
    new_xyz = np.zeros((B, S, 3), np.float32)
    grouped = np.zeros((B, S, K, D), np.float32)
    r2 = np.float32(radius) * np.float32(radius)
    for b in range(B):
        dists = np.full((N,), 1e10, np.float32)
        far = 0
        fps_idx = np.zeros((S,), np.int64)
        for i in range(S):
            fps_idx[i] = far
            c = xyz[b, far]
            d = (xyz[b, :, 0] - c[0]) ** 2 + (xyz[b, :, 1] - c[1]) ** 2 \
                + (xyz[b, :, 2] - c[2]) ** 2
            dists = np.minimum(dists, d)
            far = int(np.argmax(dists))
        q = xyz[b, fps_idx]                                     # [S, 3]
        new_xyz[b] = q
        sqrd = np.zeros((S, N), np.float32)
        for c in range(3):
            sqrd += (q[:, c:c + 1] - xyz[b, :, c][None, :]) ** 2
        for s in range(S):
            in_r = np.nonzero(sqrd[s] <= r2)[0]
            sel = in_r[:K]
            if sel.size < K:
                sel = np.concatenate([sel, np.full((K - sel.size,), sel[0],
                                                   dtype=sel.dtype)])
            grouped[b, s] = points[b, sel]
    return new_xyz, grouped


if __name__ == "__main__":
    key = jax.random.PRNGKey(0)
    B, N, D = 2, 256, 32        # batch, points, feature dim (N%128==0 -> R=2)
    S, K, radius = 32, 8, 0.2   # samples, kneighbors, radius (mixes pad/no-pad)
    kx, kp = jax.random.split(key)
    xyz = jax.random.uniform(kx, (B, N, 3), dtype=jnp.float32)
    points = jax.random.normal(kp, (B, N, D), dtype=jnp.float32)

    new_xyz, grouped = local_grouper(xyz, points, S, K, radius)
    jax.block_until_ready((new_xyz, grouped))

    ref_xyz, ref_grouped = _reference(np.asarray(xyz), np.asarray(points), S, K, radius)
    np.testing.assert_allclose(np.asarray(new_xyz), ref_xyz, rtol=1e-5, atol=1e-5)
    # grouped features go through the hi/lo bf16 split (relative error <~1e-5).
    np.testing.assert_allclose(np.asarray(grouped), ref_grouped, rtol=2e-5, atol=1e-5)

    # TODO(synk): `new_points = index_points(points, fps_idx)` is computed but
    # discarded by the PyTorch module's return, so it is intentionally omitted.
    print("KERNEL_OK")
</pallas_src>

<mosaic_0001>
module attributes {stable_mosaic.version = 11 : i64} {
  func.func @_local_grouper_kernel(%arg0: i32, %arg1: memref<1x256x3xf32, #tpu.memory_space<vmem>>, %arg2: memref<1x3x2x128xf32, #tpu.memory_space<vmem>>, %arg3: memref<1x256x32xf32, #tpu.memory_space<vmem>>, %arg4: memref<1x32x3xf32, #tpu.memory_space<vmem>>, %arg5: memref<1x32x256xf32, #tpu.memory_space<vmem>>, %arg6: memref<2x32x128xf32, #tpu.memory_space<vmem>>) attributes {dimension_semantics = [#tpu.dimension_semantics<parallel>], iteration_bounds = array<i64: 2>, scalar_prefetch = 0 : i64, scratch_operands = 1 : i64, tpu.core_type = #tpu.core_type<tc>, window_params = [{transform_indices = @transform_0, window_bounds = array<i64: 1, 256, 3>}, {transform_indices = @transform_1, window_bounds = array<i64: 1, 3, 2, 128>}, {transform_indices = @transform_2, window_bounds = array<i64: 1, 256, 32>}, {transform_indices = @transform_3, window_bounds = array<i64: 1, 32, 3>}, {transform_indices = @transform_4, window_bounds = array<i64: 1, 32, 256>}]} {
    %0 = tpu.iota {dimensions = array<i32: 0>} : vector<2x128xi32>
    %c128_i32 = arith.constant 128 : i32
    %1 = vector.broadcast %c128_i32 : i32 to vector<2x128xi32>
    %2 = arith.muli %0, %1 : vector<2x128xi32>
    %3 = tpu.iota {dimensions = array<i32: 1>} : vector<2x128xi32>
    %4 = arith.addi %2, %3 : vector<2x128xi32>
    %c0 = arith.constant 0 : index
    %c0_0 = arith.constant 0 : index
    %c0_1 = arith.constant 0 : index
    %c0_2 = arith.constant 0 : index
    %5 = vector.load %arg2[%c0, %c0_0, %c0_1, %c0_2] : memref<1x3x2x128xf32, #tpu.memory_space<vmem>>, vector<1x1x2x128xf32>
    %6 = vector.shape_cast %5 : vector<1x1x2x128xf32> to vector<2x128xf32>
    %c0_3 = arith.constant 0 : index
    %c1 = arith.constant 1 : index
    %c0_4 = arith.constant 0 : index
    %c0_5 = arith.constant 0 : index
    %7 = vector.load %arg2[%c0_3, %c1, %c0_4, %c0_5] : memref<1x3x2x128xf32, #tpu.memory_space<vmem>>, vector<1x1x2x128xf32>
    %8 = vector.shape_cast %7 : vector<1x1x2x128xf32> to vector<2x128xf32>
    %c0_6 = arith.constant 0 : index
    %c2 = arith.constant 2 : index
    %c0_7 = arith.constant 0 : index
    %c0_8 = arith.constant 0 : index
    %9 = vector.load %arg2[%c0_6, %c2, %c0_7, %c0_8] : memref<1x3x2x128xf32, #tpu.memory_space<vmem>>, vector<1x1x2x128xf32>
    %10 = vector.shape_cast %9 : vector<1x1x2x128xf32> to vector<2x128xf32>
    %cst = arith.constant 1.000000e+10 : f32
    %11 = vector.broadcast %cst : f32 to vector<2x128xf32>
    %c0_i32 = arith.constant 0 : i32
    %c0_i32_9 = arith.constant 0 : i32
    %c32_i32 = arith.constant 32 : i32
    %12 = arith.addi %c0_i32_9, %c32_i32 : i32
    %c1_i32 = arith.constant 1 : i32
    %13:2 = scf.for %arg7 = %c0_i32_9 to %12 step %c1_i32 iter_args(%arg8 = %c0_i32, %arg9 = %11) -> (i32, vector<2x128xf32>)  : i32 {
      %c0_52 = arith.constant 0 : index
      %138 = arith.index_cast %arg8 : i32 to index
      %c0_53 = arith.constant 0 : index
      %139 = vector.load %arg1[%c0_52, %138, %c0_53] : memref<1x256x3xf32, #tpu.memory_space<vmem>>, vector<1x1x3xf32>
      %140 = vector.shape_cast %139 : vector<1x1x3xf32> to vector<1x3xf32>
      %c0_54 = arith.constant 0 : index
      %141 = arith.index_cast %arg7 : i32 to index
      %c0_55 = arith.constant 0 : index
      %142 = vector.load %arg4[%c0_54, %141, %c0_55] : memref<1x32x3xf32, #tpu.memory_space<vmem>>, vector<1x1x3xf32>
      %143 = vector.shape_cast %142 : vector<1x1x3xf32> to vector<1x3xf32>
      %144 = vector.shape_cast %140 : vector<1x3xf32> to vector<1x1x3xf32>
      tpu.vector_store %arg4[%c0_54, %141, %c0_55], %144 {strides = array<i32>} : memref<1x32x3xf32, #tpu.memory_space<vmem>>, vector<1x1x3xf32>,
      %145 = vector.extract_strided_slice %140 {offsets = [0, 0], sizes = [1, 1], strides = [1, 1]} : vector<1x3xf32> to vector<1x1xf32>
      %146 = vector.extract_strided_slice %140 {offsets = [0, 1], sizes = [1, 1], strides = [1, 1]} : vector<1x3xf32> to vector<1x1xf32>
      %147 = vector.extract_strided_slice %140 {offsets = [0, 2], sizes = [1, 1], strides = [1, 1]} : vector<1x3xf32> to vector<1x1xf32>
      %148 = vector.broadcast %145 : vector<1x1xf32> to vector<2x128xf32>
      %149 = arith.subf %6, %148 : vector<2x128xf32>
      %150 = arith.mulf %149, %149 : vector<2x128xf32>
      %151 = vector.broadcast %146 : vector<1x1xf32> to vector<2x128xf32>
      %152 = arith.subf %8, %151 : vector<2x128xf32>
      %153 = arith.mulf %152, %152 : vector<2x128xf32>
      %154 = arith.addf %150, %153 : vector<2x128xf32>
      %155 = vector.broadcast %147 : vector<1x1xf32> to vector<2x128xf32>
      %156 = arith.subf %10, %155 : vector<2x128xf32>
      %157 = arith.mulf %156, %156 : vector<2x128xf32>
      %158 = arith.addf %154, %157 : vector<2x128xf32>
      %159 = vector.extract_strided_slice %158 {offsets = [0, 0], sizes = [1, 128], strides = [1, 1]} : vector<2x128xf32> to vector<1x128xf32>
      %c0_56 = arith.constant 0 : index
      %160 = arith.index_cast %arg7 : i32 to index
      %c0_57 = arith.constant 0 : index
      %161 = vector.load %arg6[%c0_56, %160, %c0_57] : memref<2x32x128xf32, #tpu.memory_space<vmem>>, vector<1x1x128xf32>
      %162 = vector.shape_cast %161 : vector<1x1x128xf32> to vector<1x128xf32>
      %163 = vector.shape_cast %159 : vector<1x128xf32> to vector<1x1x128xf32>
      tpu.vector_store %arg6[%c0_56, %160, %c0_57], %163 {strides = array<i32>} : memref<2x32x128xf32, #tpu.memory_space<vmem>>, vector<1x1x128xf32>,
      %164 = vector.extract_strided_slice %158 {offsets = [1, 0], sizes = [1, 128], strides = [1, 1]} : vector<2x128xf32> to vector<1x128xf32>
      %c1_58 = arith.constant 1 : index
      %165 = arith.index_cast %arg7 : i32 to index
      %c0_59 = arith.constant 0 : index
      %166 = vector.load %arg6[%c1_58, %165, %c0_59] : memref<2x32x128xf32, #tpu.memory_space<vmem>>, vector<1x1x128xf32>
      %167 = vector.shape_cast %166 : vector<1x1x128xf32> to vector<1x128xf32>
      %168 = vector.shape_cast %164 : vector<1x128xf32> to vector<1x1x128xf32>
      tpu.vector_store %arg6[%c1_58, %165, %c0_59], %168 {strides = array<i32>} : memref<2x32x128xf32, #tpu.memory_space<vmem>>, vector<1x1x128xf32>,
      %169 = arith.minimumf %arg9, %158 : vector<2x128xf32>
      %170 = vector.shape_cast %169 : vector<2x128xf32> to vector<1x2x128xf32>
      %cst_60 = arith.constant dense<0xFF800000> : vector<1xf32>
      %171 = vector.multi_reduction <maximumf>, %170, %cst_60 [1, 2] : vector<1x2x128xf32> to vector<1xf32>
      %172 = vector.shape_cast %171 : vector<1xf32> to vector<1x1x1xf32>
      %173 = vector.extract %172[0, 0, 0] : f32 from vector<1x1x1xf32>
      %174 = vector.broadcast %173 : f32 to vector<2x128xf32>
      %175 = arith.cmpf oeq, %169, %174 : vector<2x128xf32>
      %c256_i32 = arith.constant 256 : i32
      %176 = vector.broadcast %c256_i32 : i32 to vector<2x128xi32>
      %177 = arith.select %175, %4, %176 : vector<2x128xi1>, vector<2x128xi32>
      %178 = vector.shape_cast %177 : vector<2x128xi32> to vector<1x2x128xi32>
      %cst_61 = arith.constant dense<2147483647> : vector<1xi32>
      %179 = vector.multi_reduction <minsi>, %178, %cst_61 [1, 2] : vector<1x2x128xi32> to vector<1xi32>
      %180 = vector.shape_cast %179 : vector<1xi32> to vector<1x1x1xi32>
      %181 = vector.extract %180[0, 0, 0] : i32 from vector<1x1x1xi32>
      scf.yield %181, %169 : i32, vector<2x128xf32>
    }
    %c32_i32_10 = arith.constant 32 : i32
    %c0_11 = arith.constant 0 : index
    %c0_12 = arith.constant 0 : index
    %c0_13 = arith.constant 0 : index
    %14 = vector.load %arg6[%c0_11, %c0_12, %c0_13] : memref<2x32x128xf32, #tpu.memory_space<vmem>>, vector<1x32x128xf32>
    %15 = vector.shape_cast %14 : vector<1x32x128xf32> to vector<32x128xf32>
    %c1_14 = arith.constant 1 : index
    %c0_15 = arith.constant 0 : index
    %c0_16 = arith.constant 0 : index
    %16 = vector.load %arg6[%c1_14, %c0_15, %c0_16] : memref<2x32x128xf32, #tpu.memory_space<vmem>>, vector<1x32x128xf32>
    %17 = vector.shape_cast %16 : vector<1x32x128xf32> to vector<32x128xf32>
    %18 = tpu.concatenate %15, %17 in 1 : vector<32x128xf32>, vector<32x128xf32> -> vector<32x256xf32>
    %cst_17 = arith.constant 4.000000e-02 : f32
    %19 = vector.broadcast %cst_17 : f32 to vector<32x256xf32>
    %20 = arith.cmpf ole, %18, %19 : vector<32x256xf32>
    %21 = tpu.iota {dimensions = array<i32: 0>} : vector<256x1xi32>
    %22 = tpu.iota {dimensions = array<i32: 1>} : vector<1x256xi32>
    %23 = vector.broadcast %21 : vector<256x1xi32> to vector<256x256xi32>
    %24 = vector.broadcast %22 : vector<1x256xi32> to vector<256x256xi32>
    %25 = arith.cmpi sle, %23, %24 : vector<256x256xi32>
    %26 = arith.extui %25 : vector<256x256xi1> to vector<256x256xi32>
    %27 = arith.sitofp %26 : vector<256x256xi32> to vector<256x256xf32>
    %28 = arith.truncf %27 : vector<256x256xf32> to vector<256x256xbf16>
    %29 = arith.extui %20 : vector<32x256xi1> to vector<32x256xi32>
    %30 = arith.sitofp %29 : vector<32x256xi32> to vector<32x256xf32>
    %31 = arith.truncf %30 : vector<32x256xf32> to vector<32x256xbf16>
    %cst_18 = arith.constant dense<0.000000e+00> : vector<32x256xf32>
    %32 = tpu.matmul %31, %28, %cst_18 {dimension_numbers = #tpu.dot_dimension_numbers<[1], [0], [0], [1], [0, 0, 1, 1], [], []>} : vector<32x256xbf16>, vector<256x256xbf16>, vector<32x256xf32> -> vector<32x256xf32>
    %33 = vector.extract_strided_slice %32 {offsets = [0, 255], sizes = [32, 1], strides = [1, 1]} : vector<32x256xf32> to vector<32x1xf32>
    %cst_19 = arith.constant 0.000000e+00 : f32
    %34 = vector.broadcast %cst_19 : f32 to vector<32x256xf32>
    %35 = arith.select %20, %32, %34 : vector<32x256xi1>, vector<32x256xf32>
    %c0_20 = arith.constant 0 : index
    %c0_21 = arith.constant 0 : index
    %c0_22 = arith.constant 0 : index
    %36 = vector.load %arg3[%c0_20, %c0_21, %c0_22] : memref<1x256x32xf32, #tpu.memory_space<vmem>>, vector<1x256x32xf32>
    %37 = vector.shape_cast %36 : vector<1x256x32xf32> to vector<256x32xf32>
    %38 = arith.truncf %37 : vector<256x32xf32> to vector<256x32xbf16>
    %39 = arith.extf %38 : vector<256x32xbf16> to vector<256x32xf32>
    %40 = arith.subf %37, %39 : vector<256x32xf32>
    %41 = arith.truncf %40 : vector<256x32xf32> to vector<256x32xbf16>
    %cst_23 = arith.constant 1.000000e+00 : f32
    %42 = vector.broadcast %cst_23 : f32 to vector<32x1xf32>
    %43 = arith.cmpf oge, %33, %42 : vector<32x1xf32>
    %cst_24 = arith.constant 1.000000e+00 : f32
    %cst_25 = arith.constant 1.000000e+00 : f32
    %44 = vector.broadcast %cst_24 : f32 to vector<32x1xf32>
    %45 = vector.broadcast %cst_25 : f32 to vector<32x1xf32>
    %46 = arith.select %43, %44, %45 : vector<32x1xi1>, vector<32x1xf32>
    %47 = vector.broadcast %46 : vector<32x1xf32> to vector<32x256xf32>
    %48 = arith.cmpf oeq, %35, %47 : vector<32x256xf32>
    %49 = arith.extui %48 : vector<32x256xi1> to vector<32x256xi32>
    %50 = arith.sitofp %49 : vector<32x256xi32> to vector<32x256xf32>
    %51 = arith.truncf %50 : vector<32x256xf32> to vector<32x256xbf16>
    %cst_26 = arith.constant 2.000000e+00 : f32
    %52 = vector.broadcast %cst_26 : f32 to vector<32x1xf32>
    %53 = arith.cmpf oge, %33, %52 : vector<32x1xf32>
    %cst_27 = arith.constant 2.000000e+00 : f32
    %cst_28 = arith.constant 1.000000e+00 : f32
    %54 = vector.broadcast %cst_27 : f32 to vector<32x1xf32>
    %55 = vector.broadcast %cst_28 : f32 to vector<32x1xf32>
    %56 = arith.select %53, %54, %55 : vector<32x1xi1>, vector<32x1xf32>
    %57 = vector.broadcast %56 : vector<32x1xf32> to vector<32x256xf32>
    %58 = arith.cmpf oeq, %35, %57 : vector<32x256xf32>
    %59 = arith.extui %58 : vector<32x256xi1> to vector<32x256xi32>
    %60 = arith.sitofp %59 : vector<32x256xi32> to vector<32x256xf32>
    %61 = arith.truncf %60 : vector<32x256xf32> to vector<32x256xbf16>
    %cst_29 = arith.constant 3.000000e+00 : f32
    %62 = vector.broadcast %cst_29 : f32 to vector<32x1xf32>
    %63 = arith.cmpf oge, %33, %62 : vector<32x1xf32>
    %cst_30 = arith.constant 3.000000e+00 : f32
    %cst_31 = arith.constant 1.000000e+00 : f32
    %64 = vector.broadcast %cst_30 : f32 to vector<32x1xf32>
    %65 = vector.broadcast %cst_31 : f32 to vector<32x1xf32>
    %66 = arith.select %63, %64, %65 : vector<32x1xi1>, vector<32x1xf32>
    %67 = vector.broadcast %66 : vector<32x1xf32> to vector<32x256xf32>
    %68 = arith.cmpf oeq, %35, %67 : vector<32x256xf32>
    %69 = arith.extui %68 : vector<32x256xi1> to vector<32x256xi32>
    %70 = arith.sitofp %69 : vector<32x256xi32> to vector<32x256xf32>
    %71 = arith.truncf %70 : vector<32x256xf32> to vector<32x256xbf16>
    %cst_32 = arith.constant 4.000000e+00 : f32
    %72 = vector.broadcast %cst_32 : f32 to vector<32x1xf32>
    %73 = arith.cmpf oge, %33, %72 : vector<32x1xf32>
    %cst_33 = arith.constant 4.000000e+00 : f32
    %cst_34 = arith.constant 1.000000e+00 : f32
    %74 = vector.broadcast %cst_33 : f32 to vector<32x1xf32>
    %75 = vector.broadcast %cst_34 : f32 to vector<32x1xf32>
    %76 = arith.select %73, %74, %75 : vector<32x1xi1>, vector<32x1xf32>
    %77 = vector.broadcast %76 : vector<32x1xf32> to vector<32x256xf32>
    %78 = arith.cmpf oeq, %35, %77 : vector<32x256xf32>
    %79 = arith.extui %78 : vector<32x256xi1> to vector<32x256xi32>
    %80 = arith.sitofp %79 : vector<32x256xi32> to vector<32x256xf32>
    %81 = arith.truncf %80 : vector<32x256xf32> to vector<32x256xbf16>
    %cst_35 = arith.constant 5.000000e+00 : f32
    %82 = vector.broadcast %cst_35 : f32 to vector<32x1xf32>
    %83 = arith.cmpf oge, %33, %82 : vector<32x1xf32>
    %cst_36 = arith.constant 5.000000e+00 : f32
    %cst_37 = arith.constant 1.000000e+00 : f32
    %84 = vector.broadcast %cst_36 : f32 to vector<32x1xf32>
    %85 = vector.broadcast %cst_37 : f32 to vector<32x1xf32>
    %86 = arith.select %83, %84, %85 : vector<32x1xi1>, vector<32x1xf32>
    %87 = vector.broadcast %86 : vector<32x1xf32> to vector<32x256xf32>
    %88 = arith.cmpf oeq, %35, %87 : vector<32x256xf32>
    %89 = arith.extui %88 : vector<32x256xi1> to vector<32x256xi32>
    %90 = arith.sitofp %89 : vector<32x256xi32> to vector<32x256xf32>
    %91 = arith.truncf %90 : vector<32x256xf32> to vector<32x256xbf16>
    %cst_38 = arith.constant 6.000000e+00 : f32
    %92 = vector.broadcast %cst_38 : f32 to vector<32x1xf32>
    %93 = arith.cmpf oge, %33, %92 : vector<32x1xf32>
    %cst_39 = arith.constant 6.000000e+00 : f32
    %cst_40 = arith.constant 1.000000e+00 : f32
    %94 = vector.broadcast %cst_39 : f32 to vector<32x1xf32>
    %95 = vector.broadcast %cst_40 : f32 to vector<32x1xf32>
    %96 = arith.select %93, %94, %95 : vector<32x1xi1>, vector<32x1xf32>
    %97 = vector.broadcast %96 : vector<32x1xf32> to vector<32x256xf32>
    %98 = arith.cmpf oeq, %35, %97 : vector<32x256xf32>
    %99 = arith.extui %98 : vector<32x256xi1> to vector<32x256xi32>
    %100 = arith.sitofp %99 : vector<32x256xi32> to vector<32x256xf32>
    %101 = arith.truncf %100 : vector<32x256xf32> to vector<32x256xbf16>
    %cst_41 = arith.constant 7.000000e+00 : f32
    %102 = vector.broadcast %cst_41 : f32 to vector<32x1xf32>
    %103 = arith.cmpf oge, %33, %102 : vector<32x1xf32>
    %cst_42 = arith.constant 7.000000e+00 : f32
    %cst_43 = arith.constant 1.000000e+00 : f32
    %104 = vector.broadcast %cst_42 : f32 to vector<32x1xf32>
    %105 = vector.broadcast %cst_43 : f32 to vector<32x1xf32>
    %106 = arith.select %103, %104, %105 : vector<32x1xi1>, vector<32x1xf32>
    %107 = vector.broadcast %106 : vector<32x1xf32> to vector<32x256xf32>
    %108 = arith.cmpf oeq, %35, %107 : vector<32x256xf32>
    %109 = arith.extui %108 : vector<32x256xi1> to vector<32x256xi32>
    %110 = arith.sitofp %109 : vector<32x256xi32> to vector<32x256xf32>
    %111 = arith.truncf %110 : vector<32x256xf32> to vector<32x256xbf16>
    %cst_44 = arith.constant 8.000000e+00 : f32
    %112 = vector.broadcast %cst_44 : f32 to vector<32x1xf32>
    %113 = arith.cmpf oge, %33, %112 : vector<32x1xf32>
    %cst_45 = arith.constant 8.000000e+00 : f32
    %cst_46 = arith.constant 1.000000e+00 : f32
    %114 = vector.broadcast %cst_45 : f32 to vector<32x1xf32>
    %115 = vector.broadcast %cst_46 : f32 to vector<32x1xf32>
    %116 = arith.select %113, %114, %115 : vector<32x1xi1>, vector<32x1xf32>
    %117 = vector.broadcast %116 : vector<32x1xf32> to vector<32x256xf32>
    %118 = arith.cmpf oeq, %35, %117 : vector<32x256xf32>
    %119 = arith.extui %118 : vector<32x256xi1> to vector<32x256xi32>
    %120 = arith.sitofp %119 : vector<32x256xi32> to vector<32x256xf32>
    %121 = arith.truncf %120 : vector<32x256xf32> to vector<32x256xbf16>
    %122 = tpu.concatenate %51, %61, %71, %81, %91, %101, %111, %121 in 0 : vector<32x256xbf16>, vector<32x256xbf16>, vector<32x256xbf16>, vector<32x256xbf16>, vector<32x256xbf16>, vector<32x256xbf16>, vector<32x256xbf16>, vector<32x256xbf16> -> vector<256x256xbf16>
    %cst_47 = arith.constant dense<0.000000e+00> : vector<256x32xf32>
    %123 = tpu.matmul %122, %38, %cst_47 {dimension_numbers = #tpu.dot_dimension_numbers<[1], [0], [0], [1], [0, 0, 1, 1], [], []>} : vector<256x256xbf16>, vector<256x32xbf16>, vector<256x32xf32> -> vector<256x32xf32>
    %cst_48 = arith.constant dense<0.000000e+00> : vector<256x32xf32>
    %124 = tpu.matmul %122, %41, %cst_48 {dimension_numbers = #tpu.dot_dimension_numbers<[1], [0], [0], [1], [0, 0, 1, 1], [], []>} : vector<256x256xbf16>, vector<256x32xbf16>, vector<256x32xf32> -> vector<256x32xf32>
    %125 = arith.addf %123, %124 : vector<256x32xf32>
    %126 = vector.extract_strided_slice %125 {offsets = [0, 0], sizes = [32, 32], strides = [1, 1]} : vector<256x32xf32> to vector<32x32xf32>
    %127 = vector.extract_strided_slice %125 {offsets = [32, 0], sizes = [32, 32], strides = [1, 1]} : vector<256x32xf32> to vector<32x32xf32>
    %128 = vector.extract_strided_slice %125 {offsets = [64, 0], sizes = [32, 32], strides = [1, 1]} : vector<256x32xf32> to vector<32x32xf32>
    %129 = vector.extract_strided_slice %125 {offsets = [96, 0], sizes = [32, 32], strides = [1, 1]} : vector<256x32xf32> to vector<32x32xf32>
    %130 = vector.extract_strided_slice %125 {offsets = [128, 0], sizes = [32, 32], strides = [1, 1]} : vector<256x32xf32> to vector<32x32xf32>
    %131 = vector.extract_strided_slice %125 {offsets = [160, 0], sizes = [32, 32], strides = [1, 1]} : vector<256x32xf32> to vector<32x32xf32>
    %132 = vector.extract_strided_slice %125 {offsets = [192, 0], sizes = [32, 32], strides = [1, 1]} : vector<256x32xf32> to vector<32x32xf32>
    %133 = vector.extract_strided_slice %125 {offsets = [224, 0], sizes = [32, 32], strides = [1, 1]} : vector<256x32xf32> to vector<32x32xf32>
    %134 = tpu.concatenate %126, %127, %128, %129, %130, %131, %132, %133 in 1 : vector<32x32xf32>, vector<32x32xf32>, vector<32x32xf32>, vector<32x32xf32>, vector<32x32xf32>, vector<32x32xf32>, vector<32x32xf32>, vector<32x32xf32> -> vector<32x256xf32>
    %c0_49 = arith.constant 0 : index
    %c0_50 = arith.constant 0 : index
    %c0_51 = arith.constant 0 : index
    %135 = vector.load %arg5[%c0_49, %c0_50, %c0_51] : memref<1x32x256xf32, #tpu.memory_space<vmem>>, vector<1x32x256xf32>
    %136 = vector.shape_cast %135 : vector<1x32x256xf32> to vector<32x256xf32>
    %137 = vector.shape_cast %134 : vector<32x256xf32> to vector<1x32x256xf32>
    tpu.vector_store %arg5[%c0_49, %c0_50, %c0_51], %137 {strides = array<i32>} : memref<1x32x256xf32, #tpu.memory_space<vmem>>, vector<1x32x256xf32>,
    return
  }
  func.func @transform_0(%arg0: i32) -> (i32, i32, i32) {
    %c0_i32 = arith.constant 0 : i32
    %c0_i32_0 = arith.constant 0 : i32
    %c0_i32_1 = arith.constant 0 : i32
    return %arg0, %c0_i32, %c0_i32_0 : i32, i32, i32
  }
  func.func @transform_1(%arg0: i32) -> (i32, i32, i32, i32) {
    %c0_i32 = arith.constant 0 : i32
    %c0_i32_0 = arith.constant 0 : i32
    %c0_i32_1 = arith.constant 0 : i32
    %c0_i32_2 = arith.constant 0 : i32
    return %arg0, %c0_i32, %c0_i32_0, %c0_i32_1 : i32, i32, i32, i32
  }
  func.func @transform_2(%arg0: i32) -> (i32, i32, i32) {
    %c0_i32 = arith.constant 0 : i32
    %c0_i32_0 = arith.constant 0 : i32
    %c0_i32_1 = arith.constant 0 : i32
    return %arg0, %c0_i32, %c0_i32_0 : i32, i32, i32
  }
  func.func @transform_3(%arg0: i32) -> (i32, i32, i32) {
    %c0_i32 = arith.constant 0 : i32
    %c0_i32_0 = arith.constant 0 : i32
    %c0_i32_1 = arith.constant 0 : i32
    return %arg0, %c0_i32, %c0_i32_0 : i32, i32, i32
  }
  func.func @transform_4(%arg0: i32) -> (i32, i32, i32) {
    %c0_i32 = arith.constant 0 : i32
    %c0_i32_0 = arith.constant 0 : i32
    %c0_i32_1 = arith.constant 0 : i32
    return %arg0, %c0_i32, %c0_i32_0 : i32, i32, i32
  }
}

</mosaic_0001>

<llo_original>
// kernel: tpu_custom_call.1
$region0: #{tpu_custom_call.1}
  #allocation0 [shape = 'u32[]', space=smem, size = 0x4, offset = 0x4, fixed_abs, tag = 'smem constant byte address 0x4 - core index']
  #allocation1 [shape = 'u32[72,128]{1,0:T(1,128)}', space=vmem, size = 0x9000, scoped, tag = 'internal scratch']
  #allocation2 [shape = 'f32[2,32,128]{2,1,0:T(8,128)}', space=vmem, size = 0x8000, scoped, tag = 'scratch operand']
  %s0 = inlined_call_operand.vmem [shape: f32[2,256,3], index: 0, kind: input, shape index: {}]
  %s1 = inlined_call_operand.vmem [shape: f32[2,3,2,128], index: 1, kind: input, shape index: {}]
  %s2 = inlined_call_operand.vmem [shape: f32[2,256,32], index: 2, kind: input, shape index: {}]
  %s3 = inlined_call_operand.vmem [shape: f32[2,32,3], index: 3, kind: output, shape index: {0}]
  %s4 = inlined_call_operand.hbm [shape: f32[2,32,256], index: 4, kind: output, shape index: {1}]
  %5 = xla_tuple %s3, %s4
  %s6 = sld [smem:[#allocation0]]
  $region60: #{tpu_custom_call.1} parent=0
    _
  %s8 = ssub.s32 1, %s6
  %s9 = scalar_select 0, %s8, %s6
  $region1: #{tpu_custom_call.1} parent=0
    #allocation3 [shape = 'u8[65536]{0}', space=vmem, size = 0x10000, scoped, tag = 'output window, operand 1']
    #allocation4 [shape = 's32[2]{0}', space=sflag, size = 0x8, scoped, tag = 'scoped memory for tpu_custom_call.1']
    %10 = vsyncpa [#allocation4], 0
    %s11 = scalar_lea.sflag [#allocation4], 1
    %12 = vsyncpa %s11, 0
    loop: start=0, step=1, limit=4
    $region2: #{tpu_custom_call.1} parent=1 // loop_pre_header
      _
    $region3: #{tpu_custom_call.1} parent=1 // loop_header
      %s14 = sphi 0, %s18
      %p15 = scmp.ge.s32.totalorder %s14, 4
      %s24 = sphi 0, %s26
      %s27 = sphi 0, %s24
      %s28 = sphi 0, %s27
      %s44 = sphi 0, %s28
      %s50 = sphi 0, %s52
      %s53 = sphi 0, %s50
      %s54 = sphi 0, %s53
      %s70 = sphi 0, %s54
      %s76 = sphi 0, %s78
      %s79 = sphi 0, %s76
      %s80 = sphi 0, %s79
      %s96 = sphi 0, %s80
      %s102 = sphi 0, %s104
      %s105 = sphi 0, %s102
      %s106 = sphi 0, %s105
      %s122 = sphi 0, %s106
      %s128 = sphi 0, %s130
      %s131 = sphi 0, %s128
      %s132 = sphi 0, %s131
      %s148 = sphi 0, %s132
    $region4: #{tpu_custom_call.1} parent=1 // loop_header_branch
      %17 = sbr.rel (%p15) target = $region8
    $region5: #{tpu_custom_call.1} parent=1 // loop_body
      %s19 = ssub.s32 %s14, 1
      %s20 = ssub.s32 %s14, 2
      %s21 = sadd.s32 %s14, 1
      %s22 = ssub.s32 %s14, %s21
      %p23 = scmp.eq.s32.totalorder %s22, 0
      %s25 = sadd.s32 %s24, 1
      %s26 = scalar_select %p23, %s24, %s25
      %p29 = pneg %p23
      %p30 = scmp.eq.s32.totalorder %s14, 1
      %p31 = por %p29, %p30
      %p32 = scmp.ne.s32.totalorder %s24, %s27
      %p33 = scmp.eq.s32.totalorder %s14, 0
      %p34 = por %p32, %p33
      %p35 = scmp.ne.s32.totalorder %s24, %s27
      %p36 = scmp.eq.s32.totalorder %s19, 1
      %p37 = por %p35, %p36
      %p38 = scmp.ne.s32.totalorder %s27, %s28
      %p39 = scmp.eq.s32.totalorder %s19, 0
      %p40 = por %p38, %p39
      %p41 = scmp.ne.s32.totalorder %s27, %s28
      %p42 = scmp.eq.s32.totalorder %s20, 1
      %p43 = por %p41, %p42
      %p45 = scmp.ne.s32.totalorder %s28, %s44
      %p46 = scmp.eq.s32.totalorder %s20, 0
      %p47 = por %p45, %p46
      %s48 = ssub.s32 %s14, %s21
      %p49 = scmp.eq.s32.totalorder %s48, 0
      %s51 = sadd.s32 %s50, 1
      %s52 = scalar_select %p49, %s50, %s51
      %p55 = pneg %p49
      %p56 = scmp.eq.s32.totalorder %s14, 1
      %p57 = por %p55, %p56
      %p58 = scmp.ne.s32.totalorder %s50, %s53
      %p59 = scmp.eq.s32.totalorder %s14, 0
      %p60 = por %p58, %p59
      %p61 = scmp.ne.s32.totalorder %s50, %s53
      %p62 = scmp.eq.s32.totalorder %s19, 1
      %p63 = por %p61, %p62
      %p64 = scmp.ne.s32.totalorder %s53, %s54
      %p65 = scmp.eq.s32.totalorder %s19, 0
      %p66 = por %p64, %p65
      %p67 = scmp.ne.s32.totalorder %s53, %s54
      %p68 = scmp.eq.s32.totalorder %s20, 1
      %p69 = por %p67, %p68
      %p71 = scmp.ne.s32.totalorder %s54, %s70
      %p72 = scmp.eq.s32.totalorder %s20, 0
      %p73 = por %p71, %p72
      %s74 = ssub.s32 %s14, %s21
      %p75 = scmp.eq.s32.totalorder %s74, 0
      %s77 = sadd.s32 %s76, 1
      %s78 = scalar_select %p75, %s76, %s77
      %p81 = pneg %p75
      %p82 = scmp.eq.s32.totalorder %s14, 1
      %p83 = por %p81, %p82
      %p84 = scmp.ne.s32.totalorder %s76, %s79
      %p85 = scmp.eq.s32.totalorder %s14, 0
      %p86 = por %p84, %p85
      %p87 = scmp.ne.s32.totalorder %s76, %s79
      %p88 = scmp.eq.s32.totalorder %s19, 1
      %p89 = por %p87, %p88
      %p90 = scmp.ne.s32.totalorder %s79, %s80
      %p91 = scmp.eq.s32.totalorder %s19, 0
      %p92 = por %p90, %p91
      %p93 = scmp.ne.s32.totalorder %s79, %s80
      %p94 = scmp.eq.s32.totalorder %s20, 1
      %p95 = por %p93, %p94
      %p97 = scmp.ne.s32.totalorder %s80, %s96
      %p98 = scmp.eq.s32.totalorder %s20, 0
      %p99 = por %p97, %p98
      %s100 = ssub.s32 %s14, %s21
      %p101 = scmp.eq.s32.totalorder %s100, 0
      %s103 = sadd.s32 %s102, 1
      %s104 = scalar_select %p101, %s102, %s103
      %p107 = pneg %p101
      %p108 = scmp.eq.s32.totalorder %s14, 1
      %p109 = por %p107, %p108
      %p110 = scmp.ne.s32.totalorder %s102, %s105
      %p111 = scmp.eq.s32.totalorder %s14, 0
      %p112 = por %p110, %p111
      %p113 = scmp.ne.s32.totalorder %s102, %s105
      %p114 = scmp.eq.s32.totalorder %s19, 1
      %p115 = por %p113, %p114
      %p116 = scmp.ne.s32.totalorder %s105, %s106
      %p117 = scmp.eq.s32.totalorder %s19, 0
      %p118 = por %p116, %p117
      %p119 = scmp.ne.s32.totalorder %s105, %s106
      %p120 = scmp.eq.s32.totalorder %s20, 1
      %p121 = por %p119, %p120
      %p123 = scmp.ne.s32.totalorder %s106, %s122
      %p124 = scmp.eq.s32.totalorder %s20, 0
      %p125 = por %p123, %p124
      %s126 = ssub.s32 %s14, %s21
      %p127 = scmp.eq.s32.totalorder %s126, 0
      %s129 = sadd.s32 %s128, 1
      %s130 = scalar_select %p127, %s128, %s129
      %p133 = pneg %p127
      %p134 = scmp.eq.s32.totalorder %s14, 1
      %p135 = por %p133, %p134
      %p136 = scmp.ne.s32.totalorder %s128, %s131
      %p137 = scmp.eq.s32.totalorder %s14, 0
      %p138 = por %p136, %p137
      %p139 = scmp.ne.s32.totalorder %s128, %s131
      %p140 = scmp.eq.s32.totalorder %s19, 1
      %p141 = por %p139, %p140
      %p142 = scmp.ne.s32.totalorder %s131, %s132
      %p143 = scmp.eq.s32.totalorder %s19, 0
      %p144 = por %p142, %p143
      %p145 = scmp.ne.s32.totalorder %s131, %s132
      %p146 = scmp.eq.s32.totalorder %s20, 1
      %p147 = por %p145, %p146
      %p149 = scmp.ne.s32.totalorder %s132, %s148
      %p150 = scmp.eq.s32.totalorder %s20, 0
      %p151 = por %p149, %p150
      %p152 = scmp.le.s32.totalorder 1, %s14
      %p153 = scmp.lt.s32.totalorder %s14, 3
      %p154 = pnand %p152, %p153
      %p155 = pneg %p154
      // Predicated region
      $region9: #{tpu_custom_call.1} parent=5 // pred_check
        _
      $region10: #{tpu_custom_call.1} parent=5 // pred_check_branch
        %157 = sbr.rel (%p154) target = $region12
      $region11: #{tpu_custom_call.1} parent=5 // pred_region
        %s158 = ssub.s32 %s14, 1
      $region12: #{tpu_custom_call.1} parent=5 // pred_fallthru
        _
      %p159 = scmp.lt.s32.totalorder %s14, 2
      // Predicated region
      $region13: #{tpu_custom_call.1} parent=5 // pred_check
        %p160 = pneg %p159
      $region14: #{tpu_custom_call.1} parent=5 // pred_check_branch
        %162 = sbr.rel (%p160) target = $region16
      $region15: #{tpu_custom_call.1} parent=5 // pred_region
        // Predicated region
        $region17: #{tpu_custom_call.1} parent=15 // pred_check
          %p163 = pneg %p34
        $region18: #{tpu_custom_call.1} parent=15 // pred_check_branch
          %165 = sbr.rel (%p163) target = $region20
        $region19: #{tpu_custom_call.1} parent=15 // pred_region
          %p166 = scmp.lt.s32.totalorder %s14, 1
          %s167 = scalar_select %p166, %s14, 1
          %s168 = smul.addr %s167, 32
          %s169 = smul.addr %s168, 8
          %s170 = scalar_lea.vmem %s0, %s169
        $region20: #{tpu_custom_call.1} parent=15 // pred_fallthru
          _
        // Predicated region
        $region21: #{tpu_custom_call.1} parent=15 // pred_check
          %p171 = pneg %p60
        $region22: #{tpu_custom_call.1} parent=15 // pred_check_branch
          %173 = sbr.rel (%p171) target = $region24
        $region23: #{tpu_custom_call.1} parent=15 // pred_region
          %p174 = scmp.lt.s32.totalorder %s14, 1
          %s175 = scalar_select %p174, %s14, 1
          %s176 = smul.addr %s175, 3
          %s177 = smul.addr %s176, 2
          %s178 = scalar_lea.vmem %s1, %s177
        $region24: #{tpu_custom_call.1} parent=15 // pred_fallthru
          _
        // Predicated region
        $region25: #{tpu_custom_call.1} parent=15 // pred_check
          %p179 = pneg %p86
        $region26: #{tpu_custom_call.1} parent=15 // pred_check_branch
          %181 = sbr.rel (%p179) target = $region28
        $region27: #{tpu_custom_call.1} parent=15 // pred_region
          %p182 = scmp.lt.s32.totalorder %s14, 1
          %s183 = scalar_select %p182, %s14, 1
          %s184 = smul.addr %s183, 32
          %s185 = smul.addr %s184, 8
          %s186 = scalar_lea.vmem %s2, %s185
        $region28: #{tpu_custom_call.1} parent=15 // pred_fallthru
          _
      $region16: #{tpu_custom_call.1} parent=5 // pred_fallthru
        _
      %p187 = scmp.le.s32.totalorder 1, %s14
      %p188 = scmp.lt.s32.totalorder %s14, 3
      %p189 = pnand %p187, %p188
      %p190 = pneg %p189
      // Predicated region
      $region29: #{tpu_custom_call.1} parent=5 // pred_check
        _
      $region30: #{tpu_custom_call.1} parent=5 // pred_check_branch
        %192 = sbr.rel (%p189) target = $region32
      $region31: #{tpu_custom_call.1} parent=5 // pred_region
        %s193 = ssub.s32 %s14, 1
        %p194 = scmp.lt.s32.totalorder %s19, 1
        %s195 = scalar_select %p194, %s19, 1
        %s196 = smul.addr %s195, 32
        %s197 = smul.addr %s196, 8
        %s198 = scalar_lea.vmem %s0, %s197
        %p199 = pneg %p40
        %p200 = pneg %p37
        %p201 = scmp.lt.s32.totalorder %s19, 1
        %s202 = scalar_select %p201, %s19, 1
        %s203 = smul.addr %s202, 3
        %s204 = smul.addr %s203, 2
        %s205 = scalar_lea.vmem %s1, %s204
        %p206 = pneg %p66
        %p207 = pneg %p63
        %p208 = scmp.lt.s32.totalorder %s19, 1
        %s209 = scalar_select %p208, %s19, 1
        %s210 = smul.addr %s209, 32
        %s211 = smul.addr %s210, 8
        %s212 = scalar_lea.vmem %s2, %s211
        %p213 = pneg %p92
        %p214 = pneg %p89
        %p215 = pneg %p118
        %p216 = pneg %p115
        %p217 = scmp.lt.s32.totalorder %s19, 1
        %s218 = scalar_select %p217, %s19, 1
        %s219 = smul.addr %s218, 4
        %s220 = smul.addr %s219, 8
        %s221 = scalar_lea.vmem %s3, %s220
        %p222 = pneg %p144
        %p223 = pneg %p141
        %s224 = sand.u32 %s131, 1
        %s225 = scalar_lea.sflag [#allocation4], %s224
        %s226 = sand.u32 %s131, 1
        %s227 = smul.addr %s226, 64
        %s228 = scalar_lea.vmem [#allocation3], %s227
        %p229 = scmp.lt.s32.totalorder %s19, 1
        %s230 = scalar_select %p229, %s19, 1
        %s231 = smul.addr %s230, 32
        %s232 = smul.addr %s231, 8
        %s233 = scalar_lea.vmem %s0, %s232
        %p234 = scmp.lt.s32.totalorder %s19, 1
        %s235 = scalar_select %p234, %s19, 1
        %s236 = smul.addr %s235, 3
        %s237 = smul.addr %s236, 2
        %s238 = scalar_lea.vmem %s1, %s237
        %p239 = scmp.lt.s32.totalorder %s19, 1
        %s240 = scalar_select %p239, %s19, 1
        %s241 = smul.addr %s240, 32
        %s242 = smul.addr %s241, 8
        %s243 = scalar_lea.vmem %s2, %s242
        %p244 = scmp.lt.s32.totalorder %s19, 1
        %s245 = scalar_select %p244, %s19, 1
        %s246 = smul.addr %s245, 4
        %s247 = smul.addr %s246, 8
        %s248 = scalar_lea.vmem %s3, %s247
        %v249 = vlaneseq
        %v250 = vshrl.u32 %v249, 7
        %v251 = vmul.u32 %v250, 128
        %v252 = vlaneseq
        %v253 = vand.u32 %v252, 127
        %v254 = vadd.s32 %v251, %v253
        %v255 = vld [vmem:[%s238] sm:$0x3]
        %s256 = scalar_lea.vmem %s238, 2
        %v257 = vld [vmem:[%s256] sm:$0x3]
        %s258 = scalar_lea.vmem %s238, 4
        %v259 = vld [vmem:[%s258] sm:$0x3]
        loop: start=0, step=1, limit=32
        $region33: #{tpu_custom_call.1} parent=31 // loop_pre_header
          _
        $region34: #{tpu_custom_call.1} parent=31 // loop_header
          %s261 = sphi 0, %s265
          %p262 = scmp.ge.s32.totalorder %s261, 32
          %s266 = sphi 0, %s339
          %v267 = vphi 1e+10, %v300
        $region35: #{tpu_custom_call.1} parent=31 // loop_header_branch
          %264 = sbr.rel (%p262) target = $region39
        $region36: #{tpu_custom_call.1} parent=31 // loop_body
          %s268 = scalar_lea.vmem %s233, %s266
          %v269 = vld [vmem:[%s268] sm:$0x1]
          %s270 = scalar_lea.vmem %s248, %s261
          %vm271 = vcmask 16384
          %272 = vst.msk [vmem:[%s270] sm:$0x1] %vm271, %v269
          %s274 = vtos %v269
          %v275 = vstv %s274
          %v277 = vsub.f32 %v255, %v275
          %v278 = vmul.f32 %v277, %v277
          %279 = vrot.lane.b32.xlu0 %v269, 127
          %v280 = vpop.permute.xlu0 %279
          %s281 = vtos %v280
          %v282 = vstv %s281
          %v284 = vsub.f32 %v257, %v282
          %v285 = vmul.f32 %v284, %v284
          %v286 = vadd.f32 %v278, %v285
          %287 = vrot.lane.b32.xlu0 %v269, 126
          %v288 = vpop.permute.xlu0 %287
          %s289 = vtos %v288
          %v290 = vstv %s289
          %v292 = vsub.f32 %v259, %v290
          %v293 = vmul.f32 %v292, %v292
          %v294 = vadd.f32 %v286, %v293
          %s295 = scalar_lea.vmem [#allocation2], %s261
          %296 = vst [vmem:[%s295] sm:$0x1] %v294
          %s297 = sadd.s32 %s261, 32
          %s298 = scalar_lea.vmem [#allocation2], %s297
          %299 = vst [vmem:[%s298 - $0x1] sm:$0x2] %v294
          %v300 = vmin.f32 %v267, %v294
          %vm301 = vcmask 1041408
          %v302 = vsel %vm301, %v300, -inf
          %303 = vmax.xlane.f32.xlu0 %v302
          %v304 = vpop.xlane.xlu0 %303
          %v305 = vrot.slane %v304, 4
          %v306 = vmax.f32 %v304, %v305
          %v307 = vrot.slane %v306, 2
          %v308 = vmax.f32 %v306, %v307
          %v309 = vrot.slane %v308, 1
          %v310 = vmax.f32 %v308, %v309
          %s311 = vtos %v310
          %v312 = vstv %s311
          %vm313 = vcmp.eq.f32.partialorder %v300, %v312
          %v314 = vsel %vm313, %v254, 256
          %v315 = vsel %vm301, %v314, 2147483647
          %v316 = vand.u32 %v315, 65535
          %v317 = vshra.s32 %v315, 16
          %v318 = vcvt.s32.f32 %v316
          %v319 = vcvt.s32.f32 %v317
          %320 = vmin.xlane.f32.xlu0 %v319
          %v321 = vpop.xlane.xlu0 %320
          %vm322 = vcmp.eq.f32.partialorder %v319, %v321
          %v323 = vsel %vm322, %v318, inf
          %324 = vmin.xlane.f32.xlu0 %v323
          %v325 = vpop.xlane.xlu0 %324
          %v326 = vcvt.f32.s32 %v325
          %v327 = vcvt.f32.s32 %v321
          %v328 = vshll.u32 %v327, 16
          %v329 = vadd.s32 %v328, %v326
          %v330 = vrot.slane %v329, 4
          %vm331 = vcmp.lt.s32.totalorder %v329, %v330
          %v332 = vsel %vm331, %v329, %v330
          %v333 = vrot.slane %v332, 2
          %vm334 = vcmp.lt.s32.totalorder %v332, %v333
          %v335 = vsel %vm334, %v332, %v333
          %v336 = vrot.slane %v335, 1
          %vm337 = vcmp.lt.s32.totalorder %v335, %v336
          %v338 = vsel %vm337, %v335, %v336
          %s339 = vtos %v338
        $region37: #{tpu_custom_call.1} parent=31 // loop_footer
          %s265 = sadd.s32 1, %s261
        $region38: #{tpu_custom_call.1} parent=31 // loop_footer_branch
          %260 = sbr.rel target = $region34
        $region39: #{tpu_custom_call.1} parent=31 // loop_exit
          _
        %v340 = vld [vmem:[#allocation2] sm:$0xff]
        %v341 = vld [vmem:[#allocation2 + $0x8] sm:$0xff]
        %v342 = vld [vmem:[#allocation2 + $0x10] sm:$0xff]
        %v343 = vld [vmem:[#allocation2 + $0x18] sm:$0xff]
        %s344 = scalar_lea.vmem [#allocation2], 32
        %v345 = vld [vmem:[%s344] sm:$0xff]
        %v346 = vld [vmem:[%s344 + $0x8] sm:$0xff]
        %v347 = vld [vmem:[%s344 + $0x10] sm:$0xff]
        %v348 = vld [vmem:[%s344 + $0x18] sm:$0xff]
        %vm349 = vcmp.le.f32.partialorder %v340, 0.04
        %vm350 = vcmp.le.f32.partialorder %v345, 0.04
        %vm351 = vcmp.le.f32.partialorder %v341, 0.04
        %vm352 = vcmp.le.f32.partialorder %v346, 0.04
        %vm353 = vcmp.le.f32.partialorder %v342, 0.04
        %vm354 = vcmp.le.f32.partialorder %v347, 0.04
        %vm355 = vcmp.le.f32.partialorder %v343, 0.04
        %vm356 = vcmp.le.f32.partialorder %v348, 0.04
        %v357 = vadd.s32 %v250, 8
        %v358 = vadd.s32 %v250, 16
        %v359 = vadd.s32 %v250, 24
        %v360 = vadd.s32 %v250, 32
        %v361 = vadd.s32 %v250, 40
        %v362 = vadd.s32 %v250, 48
        %v363 = vadd.s32 %v250, 56
        %v364 = vadd.s32 %v250, 64
        %v365 = vadd.s32 %v250, 72
        %v366 = vadd.s32 %v250, 80
        %v367 = vadd.s32 %v250, 88
        %v368 = vadd.s32 %v250, 96
        %v369 = vadd.s32 %v250, 104
        %v370 = vadd.s32 %v250, 112
        %v371 = vadd.s32 %v250, 120
        %v372 = vadd.s32 %v250, 128
        %v373 = vadd.s32 %v250, 136
        %v374 = vadd.s32 %v250, 144
        %v375 = vadd.s32 %v250, 152
        %v376 = vadd.s32 %v250, 160
        %v377 = vadd.s32 %v250, 168
        %v378 = vadd.s32 %v250, 176
        %v379 = vadd.s32 %v250, 184
        %v380 = vadd.s32 %v250, 192
        %v381 = vadd.s32 %v250, 200
        %v382 = vadd.s32 %v250, 208
        %v383 = vadd.s32 %v250, 216
        %v384 = vadd.s32 %v250, 224
        %v385 = vadd.s32 %v250, 232
        %v386 = vadd.s32 %v250, 240
        %v387 = vadd.s32 %v250, 248
        %v388 = vadd.s32 %v253, 128
        %vm389 = vcmp.le.s32.totalorder %v250, %v253
        %vm390 = vcmp.le.s32.totalorder %v250, %v388
        %vm391 = vcmp.le.s32.totalorder %v357, %v253
        %vm392 = vcmp.le.s32.totalorder %v357, %v388
        %vm393 = vcmp.le.s32.totalorder %v358, %v253
        %vm394 = vcmp.le.s32.totalorder %v358, %v388
        %vm395 = vcmp.le.s32.totalorder %v359, %v253
        %vm396 = vcmp.le.s32.totalorder %v359, %v388
        %vm397 = vcmp.le.s32.totalorder %v360, %v253
        %vm398 = vcmp.le.s32.totalorder %v360, %v388
        %vm399 = vcmp.le.s32.totalorder %v361, %v253
        %vm400 = vcmp.le.s32.totalorder %v361, %v388
        %vm401 = vcmp.le.s32.totalorder %v362, %v253
        %vm402 = vcmp.le.s32.totalorder %v362, %v388
        %vm403 = vcmp.le.s32.totalorder %v363, %v253
        %vm404 = vcmp.le.s32.totalorder %v363, %v388
        %vm405 = vcmp.le.s32.totalorder %v364, %v253
        %vm406 = vcmp.le.s32.totalorder %v364, %v388
        %vm407 = vcmp.le.s32.totalorder %v365, %v253
        %vm408 = vcmp.le.s32.totalorder %v365, %v388
        %vm409 = vcmp.le.s32.totalorder %v366, %v253
        %vm410 = vcmp.le.s32.totalorder %v366, %v388
        %vm411 = vcmp.le.s32.totalorder %v367, %v253
        %vm412 = vcmp.le.s32.totalorder %v367, %v388
        %vm413 = vcmp.le.s32.totalorder %v368, %v253
        %vm414 = vcmp.le.s32.totalorder %v368, %v388
        %vm415 = vcmp.le.s32.totalorder %v369, %v253
        %vm416 = vcmp.le.s32.totalorder %v369, %v388
        %vm417 = vcmp.le.s32.totalorder %v370, %v253
        %vm418 = vcmp.le.s32.totalorder %v370, %v388
        %vm419 = vcmp.le.s32.totalorder %v371, %v253
        %vm420 = vcmp.le.s32.totalorder %v371, %v388
        %vm421 = vcmp.le.s32.totalorder %v372, %v253
        %vm422 = vcmp.le.s32.totalorder %v372, %v388
        %vm423 = vcmp.le.s32.totalorder %v373, %v253
        %vm424 = vcmp.le.s32.totalorder %v373, %v388
        %vm425 = vcmp.le.s32.totalorder %v374, %v253
        %vm426 = vcmp.le.s32.totalorder %v374, %v388
        %vm427 = vcmp.le.s32.totalorder %v375, %v253
        %vm428 = vcmp.le.s32.totalorder %v375, %v388
        %vm429 = vcmp.le.s32.totalorder %v376, %v253
        %vm430 = vcmp.le.s32.totalorder %v376, %v388
        %vm431 = vcmp.le.s32.totalorder %v377, %v253
        %vm432 = vcmp.le.s32.totalorder %v377, %v388
        %vm433 = vcmp.le.s32.totalorder %v378, %v253
        %vm434 = vcmp.le.s32.totalorder %v378, %v388
        %vm435 = vcmp.le.s32.totalorder %v379, %v253
        %vm436 = vcmp.le.s32.totalorder %v379, %v388
        %vm437 = vcmp.le.s32.totalorder %v380, %v253
        %vm438 = vcmp.le.s32.totalorder %v380, %v388
        %vm439 = vcmp.le.s32.totalorder %v381, %v253
        %vm440 = vcmp.le.s32.totalorder %v381, %v388
        %vm441 = vcmp.le.s32.totalorder %v382, %v253
        %vm442 = vcmp.le.s32.totalorder %v382, %v388
        %vm443 = vcmp.le.s32.totalorder %v383, %v253
        %vm444 = vcmp.le.s32.totalorder %v383, %v388
        %vm445 = vcmp.le.s32.totalorder %v384, %v253
        %vm446 = vcmp.le.s32.totalorder %v384, %v388
        %vm447 = vcmp.le.s32.totalorder %v385, %v253
        %vm448 = vcmp.le.s32.totalorder %v385, %v388
        %vm449 = vcmp.le.s32.totalorder %v386, %v253
        %vm450 = vcmp.le.s32.totalorder %v386, %v388
        %vm451 = vcmp.le.s32.totalorder %v387, %v253
        %vm452 = vcmp.le.s32.totalorder %v387, %v388
        %v453 = vsel %vm389, 1, 0
        %v454 = vsel %vm390, 1, 0
        %v455 = vsel %vm391, 1, 0
        %v456 = vsel %vm392, 1, 0
        %v457 = vsel %vm393, 1, 0
        %v458 = vsel %vm394, 1, 0
        %v459 = vsel %vm395, 1, 0
        %v460 = vsel %vm396, 1, 0
        %v461 = vsel %vm397, 1, 0
        %v462 = vsel %vm398, 1, 0
        %v463 = vsel %vm399, 1, 0
        %v464 = vsel %vm400, 1, 0
        %v465 = vsel %vm401, 1, 0
        %v466 = vsel %vm402, 1, 0
        %v467 = vsel %vm403, 1, 0
        %v468 = vsel %vm404, 1, 0
        %v469 = vsel %vm405, 1, 0
        %v470 = vsel %vm406, 1, 0
        %v471 = vsel %vm407, 1, 0
        %v472 = vsel %vm408, 1, 0
        %v473 = vsel %vm409, 1, 0
        %v474 = vsel %vm410, 1, 0
        %v475 = vsel %vm411, 1, 0
        %v476 = vsel %vm412, 1, 0
        %v477 = vsel %vm413, 1, 0
        %v478 = vsel %vm414, 1, 0
        %v479 = vsel %vm415, 1, 0
        %v480 = vsel %vm416, 1, 0
        %v481 = vsel %vm417, 1, 0
        %v482 = vsel %vm418, 1, 0
        %v483 = vsel %vm419, 1, 0
        %v484 = vsel %vm420, 1, 0
        %v485 = vsel %vm421, 1, 0
        %v486 = vsel %vm422, 1, 0
        %v487 = vsel %vm423, 1, 0
        %v488 = vsel %vm424, 1, 0
        %v489 = vsel %vm425, 1, 0
        %v490 = vsel %vm426, 1, 0
        %v491 = vsel %vm427, 1, 0
        %v492 = vsel %vm428, 1, 0
        %v493 = vsel %vm429, 1, 0
        %v494 = vsel %vm430, 1, 0
        %v495 = vsel %vm431, 1, 0
        %v496 = vsel %vm432, 1, 0
        %v497 = vsel %vm433, 1, 0
        %v498 = vsel %vm434, 1, 0
        %v499 = vsel %vm435, 1, 0
        %v500 = vsel %vm436, 1, 0
        %v501 = vsel %vm437, 1, 0
        %v502 = vsel %vm438, 1, 0
        %v503 = vsel %vm439, 1, 0
        %v504 = vsel %vm440, 1, 0
        %v505 = vsel %vm441, 1, 0
        %v506 = vsel %vm442, 1, 0
        %v507 = vsel %vm443, 1, 0
        %v508 = vsel %vm444, 1, 0
        %v509 = vsel %vm445, 1, 0
        %v510 = vsel %vm446, 1, 0
        %v511 = vsel %vm447, 1, 0
        %v512 = vsel %vm448, 1, 0
        %v513 = vsel %vm449, 1, 0
        %v514 = vsel %vm450, 1, 0
        %v515 = vsel %vm451, 1, 0
        %v516 = vsel %vm452, 1, 0
        %v517 = vcvt.s32.f32 %v453
        %v518 = vcvt.s32.f32 %v454
        %v519 = vcvt.s32.f32 %v455
        %v520 = vcvt.s32.f32 %v456
        %v521 = vcvt.s32.f32 %v457
        %v522 = vcvt.s32.f32 %v458
        %v523 = vcvt.s32.f32 %v459
        %v524 = vcvt.s32.f32 %v460
        %v525 = vcvt.s32.f32 %v461
        %v526 = vcvt.s32.f32 %v462
        %v527 = vcvt.s32.f32 %v463
        %v528 = vcvt.s32.f32 %v464
        %v529 = vcvt.s32.f32 %v465
        %v530 = vcvt.s32.f32 %v466
        %v531 = vcvt.s32.f32 %v467
        %v532 = vcvt.s32.f32 %v468
        %v533 = vcvt.s32.f32 %v469
        %v534 = vcvt.s32.f32 %v470
        %v535 = vcvt.s32.f32 %v471
        %v536 = vcvt.s32.f32 %v472
        %v537 = vcvt.s32.f32 %v473
        %v538 = vcvt.s32.f32 %v474
        %v539 = vcvt.s32.f32 %v475
        %v540 = vcvt.s32.f32 %v476
        %v541 = vcvt.s32.f32 %v477
        %v542 = vcvt.s32.f32 %v478
        %v543 = vcvt.s32.f32 %v479
        %v544 = vcvt.s32.f32 %v480
        %v545 = vcvt.s32.f32 %v481
        %v546 = vcvt.s32.f32 %v482
        %v547 = vcvt.s32.f32 %v483
        %v548 = vcvt.s32.f32 %v484
        %v549 = vcvt.s32.f32 %v485
        %v550 = vcvt.s32.f32 %v486
        %v551 = vcvt.s32.f32 %v487
        %v552 = vcvt.s32.f32 %v488
        %v553 = vcvt.s32.f32 %v489
        %v554 = vcvt.s32.f32 %v490
        %v555 = vcvt.s32.f32 %v491
        %v556 = vcvt.s32.f32 %v492
        %v557 = vcvt.s32.f32 %v493
        %v558 = vcvt.s32.f32 %v494
        %v559 = vcvt.s32.f32 %v495
        %v560 = vcvt.s32.f32 %v496
        %v561 = vcvt.s32.f32 %v497
        %v562 = vcvt.s32.f32 %v498
        %v563 = vcvt.s32.f32 %v499
        %v564 = vcvt.s32.f32 %v500
        %v565 = vcvt.s32.f32 %v501
        %v566 = vcvt.s32.f32 %v502
        %v567 = vcvt.s32.f32 %v503
        %v568 = vcvt.s32.f32 %v504
        %v569 = vcvt.s32.f32 %v505
        %v570 = vcvt.s32.f32 %v506
        %v571 = vcvt.s32.f32 %v507
        %v572 = vcvt.s32.f32 %v508
        %v573 = vcvt.s32.f32 %v509
        %v574 = vcvt.s32.f32 %v510
        %v575 = vcvt.s32.f32 %v511
        %v576 = vcvt.s32.f32 %v512
        %v577 = vcvt.s32.f32 %v513
        %v578 = vcvt.s32.f32 %v514
        %v579 = vcvt.s32.f32 %v515
        %v580 = vcvt.s32.f32 %v516
        %v581 = vpack.c.bf16 %v519, %v517
        %v582 = vpack.c.bf16 %v520, %v518
        %v583 = vpack.c.bf16 %v523, %v521
        %v584 = vpack.c.bf16 %v524, %v522
        %v585 = vpack.c.bf16 %v527, %v525
        %v586 = vpack.c.bf16 %v528, %v526
        %v587 = vpack.c.bf16 %v531, %v529
        %v588 = vpack.c.bf16 %v532, %v530
        %v589 = vpack.c.bf16 %v535, %v533
        %v590 = vpack.c.bf16 %v536, %v534
        %v591 = vpack.c.bf16 %v539, %v537
        %v592 = vpack.c.bf16 %v540, %v538
        %v593 = vpack.c.bf16 %v543, %v541
        %v594 = vpack.c.bf16 %v544, %v542
        %v595 = vpack.c.bf16 %v547, %v545
        %v596 = vpack.c.bf16 %v548, %v546
        %v597 = vpack.c.bf16 %v551, %v549
        %v598 = vpack.c.bf16 %v552, %v550
        %v599 = vpack.c.bf16 %v555, %v553
        %v600 = vpack.c.bf16 %v556, %v554
        %v601 = vpack.c.bf16 %v559, %v557
        %v602 = vpack.c.bf16 %v560, %v558
        %v603 = vpack.c.bf16 %v563, %v561
        %v604 = vpack.c.bf16 %v564, %v562
        %v605 = vpack.c.bf16 %v567, %v565
        %v606 = vpack.c.bf16 %v568, %v566
        %v607 = vpack.c.bf16 %v571, %v569
        %v608 = vpack.c.bf16 %v572, %v570
        %v609 = vpack.c.bf16 %v575, %v573
        %v610 = vpack.c.bf16 %v576, %v574
        %v611 = vpack.c.bf16 %v579, %v577
        %v612 = vpack.c.bf16 %v580, %v578
        %v613 = vsel %vm349, 1, 0
        %v614 = vsel %vm350, 1, 0
        %v615 = vsel %vm351, 1, 0
        %v616 = vsel %vm352, 1, 0
        %v617 = vsel %vm353, 1, 0
        %v618 = vsel %vm354, 1, 0
        %v619 = vsel %vm355, 1, 0
        %v620 = vsel %vm356, 1, 0
        %v621 = vcvt.s32.f32 %v613
        %v622 = vcvt.s32.f32 %v614
        %v623 = vcvt.s32.f32 %v615
        %v624 = vcvt.s32.f32 %v616
        %v625 = vcvt.s32.f32 %v617
        %v626 = vcvt.s32.f32 %v618
        %v627 = vcvt.s32.f32 %v619
        %v628 = vcvt.s32.f32 %v620
        %v629 = vpack.c.bf16 %v623, %v621
        %v630 = vpack.c.bf16 %v624, %v622
        %v631 = vpack.c.bf16 %v627, %v625
        %v632 = vpack.c.bf16 %v628, %v626
        %633 = vmatpush.bf16.msra.mxu0 %v595
        %634 = vmatpush.bf16.msra.mxu0 %v593
        %635 = vmatpush.bf16.msra.mxu0 %v591
        %636 = vmatpush.bf16.msra.mxu0 %v589
        %637 = vmatpush.bf16.msra.mxu0 %v587
        %638 = vmatpush.bf16.msra.mxu0 %v585
        %639 = vmatpush.bf16.msra.mxu0 %v583
        %640 = vmatpush.bf16.msra.mxu0 %v581
        %641 = vmatmul.bf16.gmra.mxu0 %v629
        %v642 = vpop.f32.mrf.mxu0
        %v643 = vadd.f32 0.0, %v642
        %v644 = vpop.f32.mrf.mxu0
        %v645 = vadd.f32 0.0, %v644
        %646 = vmatmul.bf16.gmra.mxu0 %v631
        %v647 = vpop.f32.mrf.mxu0
        %v648 = vadd.f32 0.0, %v647
        %v649 = vpop.f32.mrf.mxu0
        %v650 = vadd.f32 0.0, %v649
        %651 = vdwg.mxu0
        %652 = vmatpush.bf16.msra.mxu0 %v611
        %653 = vmatpush.bf16.msra.mxu0 %v609
        %654 = vmatpush.bf16.msra.mxu0 %v607
        %655 = vmatpush.bf16.msra.mxu0 %v605
        %656 = vmatpush.bf16.msra.mxu0 %v603
        %657 = vmatpush.bf16.msra.mxu0 %v601
        %658 = vmatpush.bf16.msra.mxu0 %v599
        %659 = vmatpush.bf16.msra.mxu0 %v597
        %660 = vmatmul.bf16.gmra.mxu0 %v630
        %v661 = vpop.f32.mrf.mxu0
        %v662 = vadd.f32 %v643, %v661
        %v663 = vpop.f32.mrf.mxu0
        %v664 = vadd.f32 %v645, %v663
        %665 = vmatmul.bf16.gmra.mxu0 %v632
        %v666 = vpop.f32.mrf.mxu0
        %v667 = vadd.f32 %v648, %v666
        %v668 = vpop.f32.mrf.mxu0
        %v669 = vadd.f32 %v650, %v668
        %670 = vdwg.mxu0
        %671 = vmatpush.bf16.msra.mxu0 %v596
        %672 = vmatpush.bf16.msra.mxu0 %v594
        %673 = vmatpush.bf16.msra.mxu0 %v592
        %674 = vmatpush.bf16.msra.mxu0 %v590
        %675 = vmatpush.bf16.msra.mxu0 %v588
        %676 = vmatpush.bf16.msra.mxu0 %v586
        %677 = vmatpush.bf16.msra.mxu0 %v584
        %678 = vmatpush.bf16.msra.mxu0 %v582
        %679 = vmatmul.bf16.gmra.mxu0 %v629
        %v680 = vpop.f32.mrf.mxu0
        %v681 = vadd.f32 0.0, %v680
        %v682 = vpop.f32.mrf.mxu0
        %v683 = vadd.f32 0.0, %v682
        %684 = vmatmul.bf16.gmra.mxu0 %v631
        %v685 = vpop.f32.mrf.mxu0
        %v686 = vadd.f32 0.0, %v685
        %v687 = vpop.f32.mrf.mxu0
        %v688 = vadd.f32 0.0, %v687
        %689 = vdwg.mxu0
        %690 = vmatpush.bf16.msra.mxu0 %v612
        %691 = vmatpush.bf16.msra.mxu0 %v610
        %692 = vmatpush.bf16.msra.mxu0 %v608
        %693 = vmatpush.bf16.msra.mxu0 %v606
        %694 = vmatpush.bf16.msra.mxu0 %v604
        %695 = vmatpush.bf16.msra.mxu0 %v602
        %696 = vmatpush.bf16.msra.mxu0 %v600
        %697 = vmatpush.bf16.msra.mxu0 %v598
        %698 = vmatmul.bf16.gmra.mxu0 %v630
        %v699 = vpop.f32.mrf.mxu0
        %v700 = vadd.f32 %v681, %v699
        %v701 = vpop.f32.mrf.mxu0
        %v702 = vadd.f32 %v683, %v701
        %703 = vmatmul.bf16.gmra.mxu0 %v632
        %v704 = vpop.f32.mrf.mxu0
        %v705 = vadd.f32 %v686, %v704
        %v706 = vpop.f32.mrf.mxu0
        %v707 = vadd.f32 %v688, %v706
        %708 = vdwg.mxu0
        %v709 = vsel %vm349, %v662, 0.0
        %v710 = vsel %vm350, %v700, 0.0
        %v711 = vsel %vm351, %v664, 0.0
        %v712 = vsel %vm352, %v702, 0.0
        %v713 = vsel %vm353, %v667, 0.0
        %v714 = vsel %vm354, %v705, 0.0
        %v715 = vsel %vm355, %v669, 0.0
        %v716 = vsel %vm356, %v707, 0.0
        %v717 = vld [vmem:[%s243] sm:$0xff]
        %v718 = vld [vmem:[%s243 + $0x8] sm:$0xff]
        %v719 = vld [vmem:[%s243 + $0x10] sm:$0xff]
        %v720 = vld [vmem:[%s243 + $0x18] sm:$0xff]
        %v721 = vld [vmem:[%s243 + $0x20] sm:$0xff]
        %v722 = vld [vmem:[%s243 + $0x28] sm:$0xff]
        %v723 = vld [vmem:[%s243 + $0x30] sm:$0xff]
        %v724 = vld [vmem:[%s243 + $0x38] sm:$0xff]
        %v725 = vld [vmem:[%s243 + $0x40] sm:$0xff]
        %v726 = vld [vmem:[%s243 + $0x48] sm:$0xff]
        %v727 = vld [vmem:[%s243 + $0x50] sm:$0xff]
        %v728 = vld [vmem:[%s243 + $0x58] sm:$0xff]
        %v729 = vld [vmem:[%s243 + $0x60] sm:$0xff]
        %v730 = vld [vmem:[%s243 + $0x68] sm:$0xff]
        %v731 = vld [vmem:[%s243 + $0x70] sm:$0xff]
        %v732 = vld [vmem:[%s243 + $0x78] sm:$0xff]
        %v733 = vld [vmem:[%s243 + $0x80] sm:$0xff]
        %v734 = vld [vmem:[%s243 + $0x88] sm:$0xff]
        %v735 = vld [vmem:[%s243 + $0x90] sm:$0xff]
        %v736 = vld [vmem:[%s243 + $0x98] sm:$0xff]
        %v737 = vld [vmem:[%s243 + $0xa0] sm:$0xff]
        %v738 = vld [vmem:[%s243 + $0xa8] sm:$0xff]
        %v739 = vld [vmem:[%s243 + $0xb0] sm:$0xff]
        %v740 = vld [vmem:[%s243 + $0xb8] sm:$0xff]
        %v741 = vld [vmem:[%s243 + $0xc0] sm:$0xff]
        %v742 = vld [vmem:[%s243 + $0xc8] sm:$0xff]
        %v743 = vld [vmem:[%s243 + $0xd0] sm:$0xff]
        %v744 = vld [vmem:[%s243 + $0xd8] sm:$0xff]
        %v745 = vld [vmem:[%s243 + $0xe0] sm:$0xff]
        %v746 = vld [vmem:[%s243 + $0xe8] sm:$0xff]
        %v747 = vld [vmem:[%s243 + $0xf0] sm:$0xff]
        %v748 = vld [vmem:[%s243 + $0xf8] sm:$0xff]
        %v749 = vpack.c.bf16 %v717, %v717
        %v750 = vpack.c.bf16 %v718, %v718
        %v751 = vpack.c.bf16 %v719, %v719
        %v752 = vpack.c.bf16 %v720, %v720
        %v753 = vpack.c.bf16 %v721, %v721
        %v754 = vpack.c.bf16 %v722, %v722
        %v755 = vpack.c.bf16 %v723, %v723
        %v756 = vpack.c.bf16 %v724, %v724
        %v757 = vpack.c.bf16 %v725, %v725
        %v758 = vpack.c.bf16 %v726, %v726
        %v759 = vpack.c.bf16 %v727, %v727
        %v760 = vpack.c.bf16 %v728, %v728
        %v761 = vpack.c.bf16 %v729, %v729
        %v762 = vpack.c.bf16 %v730, %v730
        %v763 = vpack.c.bf16 %v731, %v731
        %v764 = vpack.c.bf16 %v732, %v732
        %v765 = vpack.c.bf16 %v733, %v733
        %v766 = vpack.c.bf16 %v734, %v734
        %v767 = vpack.c.bf16 %v735, %v735
        %v768 = vpack.c.bf16 %v736, %v736
        %v769 = vpack.c.bf16 %v737, %v737
        %v770 = vpack.c.bf16 %v738, %v738
        %v771 = vpack.c.bf16 %v739, %v739
        %v772 = vpack.c.bf16 %v740, %v740
        %v773 = vpack.c.bf16 %v741, %v741
        %v774 = vpack.c.bf16 %v742, %v742
        %v775 = vpack.c.bf16 %v743, %v743
        %v776 = vpack.c.bf16 %v744, %v744
        %v777 = vpack.c.bf16 %v745, %v745
        %v778 = vpack.c.bf16 %v746, %v746
        %v779 = vpack.c.bf16 %v747, %v747
        %v780 = vpack.c.bf16 %v748, %v748
        %v781 = vunpack.c.l.bf16 %v749
        %v782 = vunpack.c.l.bf16 %v750
        %v783 = vunpack.c.l.bf16 %v751
        %v784 = vunpack.c.l.bf16 %v752
        %v785 = vunpack.c.l.bf16 %v753
        %v786 = vunpack.c.l.bf16 %v754
        %v787 = vunpack.c.l.bf16 %v755
        %v788 = vunpack.c.l.bf16 %v756
        %v789 = vunpack.c.l.bf16 %v757
        %v790 = vunpack.c.l.bf16 %v758
        %v791 = vunpack.c.l.bf16 %v759
        %v792 = vunpack.c.l.bf16 %v760
        %v793 = vunpack.c.l.bf16 %v761
        %v794 = vunpack.c.l.bf16 %v762
        %v795 = vunpack.c.l.bf16 %v763
        %v796 = vunpack.c.l.bf16 %v764
        %v797 = vunpack.c.l.bf16 %v765
        %v798 = vunpack.c.l.bf16 %v766
        %v799 = vunpack.c.l.bf16 %v767
        %v800 = vunpack.c.l.bf16 %v768
        %v801 = vunpack.c.l.bf16 %v769
        %v802 = vunpack.c.l.bf16 %v770
        %v803 = vunpack.c.l.bf16 %v771
        %v804 = vunpack.c.l.bf16 %v772
        %v805 = vunpack.c.l.bf16 %v773
        %v806 = vunpack.c.l.bf16 %v774
        %v807 = vunpack.c.l.bf16 %v775
        %v808 = vunpack.c.l.bf16 %v776
        %v809 = vunpack.c.l.bf16 %v777
        %v810 = vunpack.c.l.bf16 %v778
        %v811 = vunpack.c.l.bf16 %v779
        %v812 = vunpack.c.l.bf16 %v780
        %v813 = vsub.f32 %v717, %v781
        %v814 = vsub.f32 %v718, %v782
        %v815 = vsub.f32 %v719, %v783
        %v816 = vsub.f32 %v720, %v784
        %v817 = vsub.f32 %v721, %v785
        %v818 = vsub.f32 %v722, %v786
        %v819 = vsub.f32 %v723, %v787
        %v820 = vsub.f32 %v724, %v788
        %v821 = vsub.f32 %v725, %v789
        %v822 = vsub.f32 %v726, %v790
        %v823 = vsub.f32 %v727, %v791
        %v824 = vsub.f32 %v728, %v792
        %v825 = vsub.f32 %v729, %v793
        %v826 = vsub.f32 %v730, %v794
        %v827 = vsub.f32 %v731, %v795
        %v828 = vsub.f32 %v732, %v796
        %v829 = vsub.f32 %v733, %v797
        %v830 = vsub.f32 %v734, %v798
        %v831 = vsub.f32 %v735, %v799
        %v832 = vsub.f32 %v736, %v800
        %v833 = vsub.f32 %v737, %v801
        %v834 = vsub.f32 %v738, %v802
        %v835 = vsub.f32 %v739, %v803
        %v836 = vsub.f32 %v740, %v804
        %v837 = vsub.f32 %v741, %v805
        %v838 = vsub.f32 %v742, %v806
        %v839 = vsub.f32 %v743, %v807
        %v840 = vsub.f32 %v744, %v808
        %v841 = vsub.f32 %v745, %v809
        %v842 = vsub.f32 %v746, %v810
        %v843 = vsub.f32 %v747, %v811
        %v844 = vsub.f32 %v748, %v812
        %v845 = vpack.c.bf16 %v814, %v813
        %v846 = vpack.c.bf16 %v816, %v815
        %v847 = vpack.c.bf16 %v818, %v817
        %v848 = vpack.c.bf16 %v820, %v819
        %v849 = vpack.c.bf16 %v822, %v821
        %v850 = vpack.c.bf16 %v824, %v823
        %v851 = vpack.c.bf16 %v826, %v825
        %v852 = vpack.c.bf16 %v828, %v827
        %v853 = vpack.c.bf16 %v830, %v829
        %v854 = vpack.c.bf16 %v832, %v831
        %v855 = vpack.c.bf16 %v834, %v833
        %v856 = vpack.c.bf16 %v836, %v835
        %v857 = vpack.c.bf16 %v838, %v837
        %v858 = vpack.c.bf16 %v840, %v839
        %v859 = vpack.c.bf16 %v842, %v841
        %v860 = vpack.c.bf16 %v844, %v843
        %vm861 = vcmp.eq.f32.partialorder %v709, 1.0
        %vm862 = vcmp.eq.f32.partialorder %v710, 1.0
        %vm863 = vcmp.eq.f32.partialorder %v711, 1.0
        %vm864 = vcmp.eq.f32.partialorder %v712, 1.0
        %vm865 = vcmp.eq.f32.partialorder %v713, 1.0
        %vm866 = vcmp.eq.f32.partialorder %v714, 1.0
        %vm867 = vcmp.eq.f32.partialorder %v715, 1.0
        %vm868 = vcmp.eq.f32.partialorder %v716, 1.0
        %v869 = vsel %vm861, 1, 0
        %v870 = vsel %vm862, 1, 0
        %v871 = vsel %vm863, 1, 0
        %v872 = vsel %vm864, 1, 0
        %v873 = vsel %vm865, 1, 0
        %v874 = vsel %vm866, 1, 0
        %v875 = vsel %vm867, 1, 0
        %v876 = vsel %vm868, 1, 0
        %v877 = vcvt.s32.f32 %v869
        %v878 = vcvt.s32.f32 %v870
        %v879 = vcvt.s32.f32 %v871
        %v880 = vcvt.s32.f32 %v872
        %v881 = vcvt.s32.f32 %v873
        %v882 = vcvt.s32.f32 %v874
        %v883 = vcvt.s32.f32 %v875
        %v884 = vcvt.s32.f32 %v876
        %v885 = vpack.c.bf16 %v878, %v877
        %v886 = vpack.c.bf16 %v880, %v879
        %v887 = vpack.c.bf16 %v882, %v881
        %v888 = vpack.c.bf16 %v884, %v883
        %vm889 = vcmp.ge.f32.partialorder %v700, 2.0
        %vm890 = vcmp.ge.f32.partialorder %v702, 2.0
        %vm891 = vcmp.ge.f32.partialorder %v705, 2.0
        %vm892 = vcmp.ge.f32.partialorder %v707, 2.0
        %v893 = vsel %vm889, 2.0, 1.0
        %v894 = vsel %vm890, 2.0, 1.0
        %v895 = vsel %vm891, 2.0, 1.0
        %v896 = vsel %vm892, 2.0, 1.0
        %898 = vset.pattern.permute.xlu0 127
        %899 = vperm.xlu0 %898, %v893
        %v900 = vpop.permute.xlu0 %899
        %903 = vset.pattern.permute.xlu0 127
        %904 = vperm.xlu0 %903, %v894
        %v905 = vpop.permute.xlu0 %904
        %908 = vset.pattern.permute.xlu0 127
        %909 = vperm.xlu0 %908, %v895
        %v910 = vpop.permute.xlu0 %909
        %913 = vset.pattern.permute.xlu0 127
        %914 = vperm.xlu0 %913, %v896
        %v915 = vpop.permute.xlu0 %914
        %vm917 = vcmp.eq.f32.partialorder %v709, %v900
        %vm918 = vcmp.eq.f32.partialorder %v710, %v900
        %vm919 = vcmp.eq.f32.partialorder %v711, %v905
        %vm920 = vcmp.eq.f32.partialorder %v712, %v905
        %vm921 = vcmp.eq.f32.partialorder %v713, %v910
        %vm922 = vcmp.eq.f32.partialorder %v714, %v910
        %vm923 = vcmp.eq.f32.partialorder %v715, %v915
        %vm924 = vcmp.eq.f32.partialorder %v716, %v915
        %v925 = vsel %vm917, 1, 0
        %v926 = vsel %vm918, 1, 0
        %v927 = vsel %vm919, 1, 0
        %v928 = vsel %vm920, 1, 0
        %v929 = vsel %vm921, 1, 0
        %v930 = vsel %vm922, 1, 0
        %v931 = vsel %vm923, 1, 0
        %v932 = vsel %vm924, 1, 0
        %v933 = vcvt.s32.f32 %v925
        %v934 = vcvt.s32.f32 %v926
        %v935 = vcvt.s32.f32 %v927
        %v936 = vcvt.s32.f32 %v928
        %v937 = vcvt.s32.f32 %v929
        %v938 = vcvt.s32.f32 %v930
        %v939 = vcvt.s32.f32 %v931
        %v940 = vcvt.s32.f32 %v932
        %v941 = vpack.c.bf16 %v934, %v933
        %v942 = vpack.c.bf16 %v936, %v935
        %v943 = vpack.c.bf16 %v938, %v937
        %v944 = vpack.c.bf16 %v940, %v939
        %vm945 = vcmp.ge.f32.partialorder %v700, 3.0
        %vm946 = vcmp.ge.f32.partialorder %v702, 3.0
        %vm947 = vcmp.ge.f32.partialorder %v705, 3.0
        %vm948 = vcmp.ge.f32.partialorder %v707, 3.0
        %v949 = vsel %vm945, 3.0, 1.0
        %v950 = vsel %vm946, 3.0, 1.0
        %v951 = vsel %vm947, 3.0, 1.0
        %v952 = vsel %vm948, 3.0, 1.0
        %954 = vset.pattern.permute.xlu0 127
        %955 = vperm.xlu0 %954, %v949
        %v956 = vpop.permute.xlu0 %955
        %959 = vset.pattern.permute.xlu0 127
        %960 = vperm.xlu0 %959, %v950
        %v961 = vpop.permute.xlu0 %960
        %964 = vset.pattern.permute.xlu0 127
        %965 = vperm.xlu0 %964, %v951
        %v966 = vpop.permute.xlu0 %965
        %969 = vset.pattern.permute.xlu0 127
        %970 = vperm.xlu0 %969, %v952
        %v971 = vpop.permute.xlu0 %970
        %vm973 = vcmp.eq.f32.partialorder %v709, %v956
        %vm974 = vcmp.eq.f32.partialorder %v710, %v956
        %vm975 = vcmp.eq.f32.partialorder %v711, %v961
        %vm976 = vcmp.eq.f32.partialorder %v712, %v961
        %vm977 = vcmp.eq.f32.partialorder %v713, %v966
        %vm978 = vcmp.eq.f32.partialorder %v714, %v966
        %vm979 = vcmp.eq.f32.partialorder %v715, %v971
        %vm980 = vcmp.eq.f32.partialorder %v716, %v971
        %v981 = vsel %vm973, 1, 0
        %v982 = vsel %vm974, 1, 0
        %v983 = vsel %vm975, 1, 0
        %v984 = vsel %vm976, 1, 0
        %v985 = vsel %vm977, 1, 0
        %v986 = vsel %vm978, 1, 0
        %v987 = vsel %vm979, 1, 0
        %v988 = vsel %vm980, 1, 0
        %v989 = vcvt.s32.f32 %v981
        %v990 = vcvt.s32.f32 %v982
        %v991 = vcvt.s32.f32 %v983
        %v992 = vcvt.s32.f32 %v984
        %v993 = vcvt.s32.f32 %v985
        %v994 = vcvt.s32.f32 %v986
        %v995 = vcvt.s32.f32 %v987
        %v996 = vcvt.s32.f32 %v988
        %v997 = vpack.c.bf16 %v990, %v989
        %v998 = vpack.c.bf16 %v992, %v991
        %v999 = vpack.c.bf16 %v994, %v993
        %v1000 = vpack.c.bf16 %v996, %v995
        %vm1001 = vcmp.ge.f32.partialorder %v700, 4.0
        %vm1002 = vcmp.ge.f32.partialorder %v702, 4.0
        %vm1003 = vcmp.ge.f32.partialorder %v705, 4.0
        %vm1004 = vcmp.ge.f32.partialorder %v707, 4.0
        %v1005 = vsel %vm1001, 4.0, 1.0
        %v1006 = vsel %vm1002, 4.0, 1.0
        %v1007 = vsel %vm1003, 4.0, 1.0
        %v1008 = vsel %vm1004, 4.0, 1.0
        %1010 = vset.pattern.permute.xlu0 127
        %1011 = vperm.xlu0 %1010, %v1005
        %v1012 = vpop.permute.xlu0 %1011
        %1015 = vset.pattern.permute.xlu0 127
        %1016 = vperm.xlu0 %1015, %v1006
        %v1017 = vpop.permute.xlu0 %1016
        %1020 = vset.pattern.permute.xlu0 127
        %1021 = vperm.xlu0 %1020, %v1007
        %v1022 = vpop.permute.xlu0 %1021
        %1025 = vset.pattern.permute.xlu0 127
        %1026 = vperm.xlu0 %1025, %v1008
        %v1027 = vpop.permute.xlu0 %1026
        %vm1029 = vcmp.eq.f32.partialorder %v709, %v1012
        %vm1030 = vcmp.eq.f32.partialorder %v710, %v1012
        %vm1031 = vcmp.eq.f32.partialorder %v711, %v1017
        %vm1032 = vcmp.eq.f32.partialorder %v712, %v1017
        %vm1033 = vcmp.eq.f32.partialorder %v713, %v1022
        %vm1034 = vcmp.eq.f32.partialorder %v714, %v1022
        %vm1035 = vcmp.eq.f32.partialorder %v715, %v1027
        %vm1036 = vcmp.eq.f32.partialorder %v716, %v1027
        %v1037 = vsel %vm1029, 1, 0
        %v1038 = vsel %vm1030, 1, 0
        %v1039 = vsel %vm1031, 1, 0
        %v1040 = vsel %vm1032, 1, 0
        %v1041 = vsel %vm1033, 1, 0
        %v1042 = vsel %vm1034, 1, 0
        %v1043 = vsel %vm1035, 1, 0
        %v1044 = vsel %vm1036, 1, 0
        %v1045 = vcvt.s32.f32 %v1037
        %v1046 = vcvt.s32.f32 %v1038
        %v1047 = vcvt.s32.f32 %v1039
        %v1048 = vcvt.s32.f32 %v1040
        %v1049 = vcvt.s32.f32 %v1041
        %v1050 = vcvt.s32.f32 %v1042
        %v1051 = vcvt.s32.f32 %v1043
        %v1052 = vcvt.s32.f32 %v1044
        %v1053 = vpack.c.bf16 %v1046, %v1045
        %v1054 = vpack.c.bf16 %v1048, %v1047
        %v1055 = vpack.c.bf16 %v1050, %v1049
        %v1056 = vpack.c.bf16 %v1052, %v1051
        %vm1057 = vcmp.ge.f32.partialorder %v700, 5.0
        %vm1058 = vcmp.ge.f32.partialorder %v702, 5.0
        %vm1059 = vcmp.ge.f32.partialorder %v705, 5.0
        %vm1060 = vcmp.ge.f32.partialorder %v707, 5.0
        %v1061 = vsel %vm1057, 5.0, 1.0
        %v1062 = vsel %vm1058, 5.0, 1.0
        %v1063 = vsel %vm1059, 5.0, 1.0
        %v1064 = vsel %vm1060, 5.0, 1.0
        %1066 = vset.pattern.permute.xlu0 127
        %1067 = vperm.xlu0 %1066, %v1061
        %v1068 = vpop.permute.xlu0 %1067
        %1071 = vset.pattern.permute.xlu0 127
        %1072 = vperm.xlu0 %1071, %v1062
        %v1073 = vpop.permute.xlu0 %1072
        %1076 = vset.pattern.permute.xlu0 127
        %1077 = vperm.xlu0 %1076, %v1063
        %v1078 = vpop.permute.xlu0 %1077
        %1081 = vset.pattern.permute.xlu0 127
        %1082 = vperm.xlu0 %1081, %v1064
        %v1083 = vpop.permute.xlu0 %1082
        %vm1085 = vcmp.eq.f32.partialorder %v709, %v1068
        %vm1086 = vcmp.eq.f32.partialorder %v710, %v1068
        %vm1087 = vcmp.eq.f32.partialorder %v711, %v1073
        %vm1088 = vcmp.eq.f32.partialorder %v712, %v1073
        %vm1089 = vcmp.eq.f32.partialorder %v713, %v1078
        %vm1090 = vcmp.eq.f32.partialorder %v714, %v1078
        %vm1091 = vcmp.eq.f32.partialorder %v715, %v1083
        %vm1092 = vcmp.eq.f32.partialorder %v716, %v1083
        %v1093 = vsel %vm1085, 1, 0
        %v1094 = vsel %vm1086, 1, 0
        %v1095 = vsel %vm1087, 1, 0
        %v1096 = vsel %vm1088, 1, 0
        %v1097 = vsel %vm1089, 1, 0
        %v1098 = vsel %vm1090, 1, 0
        %v1099 = vsel %vm1091, 1, 0
        %v1100 = vsel %vm1092, 1, 0
        %v1101 = vcvt.s32.f32 %v1093
        %v1102 = vcvt.s32.f32 %v1094
        %v1103 = vcvt.s32.f32 %v1095
        %v1104 = vcvt.s32.f32 %v1096
        %v1105 = vcvt.s32.f32 %v1097
        %v1106 = vcvt.s32.f32 %v1098
        %v1107 = vcvt.s32.f32 %v1099
        %v1108 = vcvt.s32.f32 %v1100
        %v1109 = vpack.c.bf16 %v1102, %v1101
        %v1110 = vpack.c.bf16 %v1104, %v1103
        %v1111 = vpack.c.bf16 %v1106, %v1105
        %v1112 = vpack.c.bf16 %v1108, %v1107
        %vm1113 = vcmp.ge.f32.partialorder %v700, 6.0
        %vm1114 = vcmp.ge.f32.partialorder %v702, 6.0
        %vm1115 = vcmp.ge.f32.partialorder %v705, 6.0
        %vm1116 = vcmp.ge.f32.partialorder %v707, 6.0
        %v1117 = vsel %vm1113, 6.0, 1.0
        %v1118 = vsel %vm1114, 6.0, 1.0
        %v1119 = vsel %vm1115, 6.0, 1.0
        %v1120 = vsel %vm1116, 6.0, 1.0
        %1122 = vset.pattern.permute.xlu0 127
        %1123 = vperm.xlu0 %1122, %v1117
        %v1124 = vpop.permute.xlu0 %1123
        %1127 = vset.pattern.permute.xlu0 127
        %1128 = vperm.xlu0 %1127, %v1118
        %v1129 = vpop.permute.xlu0 %1128
        %1132 = vset.pattern.permute.xlu0 127
        %1133 = vperm.xlu0 %1132, %v1119
        %v1134 = vpop.permute.xlu0 %1133
        %1137 = vset.pattern.permute.xlu0 127
        %1138 = vperm.xlu0 %1137, %v1120
        %v1139 = vpop.permute.xlu0 %1138
        %vm1141 = vcmp.eq.f32.partialorder %v709, %v1124
        %vm1142 = vcmp.eq.f32.partialorder %v710, %v1124
        %vm1143 = vcmp.eq.f32.partialorder %v711, %v1129
        %vm1144 = vcmp.eq.f32.partialorder %v712, %v1129
        %vm1145 = vcmp.eq.f32.partialorder %v713, %v1134
        %vm1146 = vcmp.eq.f32.partialorder %v714, %v1134
        %vm1147 = vcmp.eq.f32.partialorder %v715, %v1139
        %vm1148 = vcmp.eq.f32.partialorder %v716, %v1139
        %v1149 = vsel %vm1141, 1, 0
        %v1150 = vsel %vm1142, 1, 0
        %v1151 = vsel %vm1143, 1, 0
        %v1152 = vsel %vm1144, 1, 0
        %v1153 = vsel %vm1145, 1, 0
        %v1154 = vsel %vm1146, 1, 0
        %v1155 = vsel %vm1147, 1, 0
        %v1156 = vsel %vm1148, 1, 0
        %v1157 = vcvt.s32.f32 %v1149
        %v1158 = vcvt.s32.f32 %v1150
        %v1159 = vcvt.s32.f32 %v1151
        %v1160 = vcvt.s32.f32 %v1152
        %v1161 = vcvt.s32.f32 %v1153
        %v1162 = vcvt.s32.f32 %v1154
        %v1163 = vcvt.s32.f32 %v1155
        %v1164 = vcvt.s32.f32 %v1156
        %v1165 = vpack.c.bf16 %v1158, %v1157
        %v1166 = vpack.c.bf16 %v1160, %v1159
        %v1167 = vpack.c.bf16 %v1162, %v1161
        %v1168 = vpack.c.bf16 %v1164, %v1163
        %vm1169 = vcmp.ge.f32.partialorder %v700, 7.0
        %vm1170 = vcmp.ge.f32.partialorder %v702, 7.0
        %vm1171 = vcmp.ge.f32.partialorder %v705, 7.0
        %vm1172 = vcmp.ge.f32.partialorder %v707, 7.0
        %v1173 = vsel %vm1169, 7.0, 1.0
        %v1174 = vsel %vm1170, 7.0, 1.0
        %v1175 = vsel %vm1171, 7.0, 1.0
        %v1176 = vsel %vm1172, 7.0, 1.0
        %1178 = vset.pattern.permute.xlu0 127
        %1179 = vperm.xlu0 %1178, %v1173
        %v1180 = vpop.permute.xlu0 %1179
        %1183 = vset.pattern.permute.xlu0 127
        %1184 = vperm.xlu0 %1183, %v1174
        %v1185 = vpop.permute.xlu0 %1184
        %1188 = vset.pattern.permute.xlu0 127
        %1189 = vperm.xlu0 %1188, %v1175
        %v1190 = vpop.permute.xlu0 %1189
        %1193 = vset.pattern.permute.xlu0 127
        %1194 = vperm.xlu0 %1193, %v1176
        %v1195 = vpop.permute.xlu0 %1194
        %vm1197 = vcmp.eq.f32.partialorder %v709, %v1180
        %vm1198 = vcmp.eq.f32.partialorder %v710, %v1180
        %vm1199 = vcmp.eq.f32.partialorder %v711, %v1185
        %vm1200 = vcmp.eq.f32.partialorder %v712, %v1185
        %vm1201 = vcmp.eq.f32.partialorder %v713, %v1190
        %vm1202 = vcmp.eq.f32.partialorder %v714, %v1190
        %vm1203 = vcmp.eq.f32.partialorder %v715, %v1195
        %vm1204 = vcmp.eq.f32.partialorder %v716, %v1195
        %v1205 = vsel %vm1197, 1, 0
        %v1206 = vsel %vm1198, 1, 0
        %v1207 = vsel %vm1199, 1, 0
        %v1208 = vsel %vm1200, 1, 0
        %v1209 = vsel %vm1201, 1, 0
        %v1210 = vsel %vm1202, 1, 0
        %v1211 = vsel %vm1203, 1, 0
        %v1212 = vsel %vm1204, 1, 0
        %v1213 = vcvt.s32.f32 %v1205
        %v1214 = vcvt.s32.f32 %v1206
        %v1215 = vcvt.s32.f32 %v1207
        %v1216 = vcvt.s32.f32 %v1208
        %v1217 = vcvt.s32.f32 %v1209
        %v1218 = vcvt.s32.f32 %v1210
        %v1219 = vcvt.s32.f32 %v1211
        %v1220 = vcvt.s32.f32 %v1212
        %v1221 = vpack.c.bf16 %v1214, %v1213
        %v1222 = vpack.c.bf16 %v1216, %v1215
        %v1223 = vpack.c.bf16 %v1218, %v1217
        %v1224 = vpack.c.bf16 %v1220, %v1219
        %vm1225 = vcmp.ge.f32.partialorder %v700, 8.0
        %vm1226 = vcmp.ge.f32.partialorder %v702, 8.0
        %vm1227 = vcmp.ge.f32.partialorder %v705, 8.0
        %vm1228 = vcmp.ge.f32.partialorder %v707, 8.0
        %v1229 = vsel %vm1225, 8.0, 1.0
        %v1230 = vsel %vm1226, 8.0, 1.0
        %v1231 = vsel %vm1227, 8.0, 1.0
        %v1232 = vsel %vm1228, 8.0, 1.0
        %1234 = vset.pattern.permute.xlu0 127
        %1235 = vperm.xlu0 %1234, %v1229
        %v1236 = vpop.permute.xlu0 %1235
        %1239 = vset.pattern.permute.xlu0 127
        %1240 = vperm.xlu0 %1239, %v1230
        %v1241 = vpop.permute.xlu0 %1240
        %1244 = vset.pattern.permute.xlu0 127
        %1245 = vperm.xlu0 %1244, %v1231
        %v1246 = vpop.permute.xlu0 %1245
        %1249 = vset.pattern.permute.xlu0 127
        %1250 = vperm.xlu0 %1249, %v1232
        %v1251 = vpop.permute.xlu0 %1250
        %vm1253 = vcmp.eq.f32.partialorder %v709, %v1236
        %vm1254 = vcmp.eq.f32.partialorder %v710, %v1236
        %vm1255 = vcmp.eq.f32.partialorder %v711, %v1241
        %vm1256 = vcmp.eq.f32.partialorder %v712, %v1241
        %vm1257 = vcmp.eq.f32.partialorder %v713, %v1246
        %vm1258 = vcmp.eq.f32.partialorder %v714, %v1246
        %vm1259 = vcmp.eq.f32.partialorder %v715, %v1251
        %vm1260 = vcmp.eq.f32.partialorder %v716, %v1251
        %v1261 = vsel %vm1253, 1, 0
        %v1262 = vsel %vm1254, 1, 0
        %v1263 = vsel %vm1255, 1, 0
        %v1264 = vsel %vm1256, 1, 0
        %v1265 = vsel %vm1257, 1, 0
        %v1266 = vsel %vm1258, 1, 0
        %v1267 = vsel %vm1259, 1, 0
        %v1268 = vsel %vm1260, 1, 0
        %v1269 = vcvt.s32.f32 %v1261
        %v1270 = vcvt.s32.f32 %v1262
        %v1271 = vcvt.s32.f32 %v1263
        %v1272 = vcvt.s32.f32 %v1264
        %v1273 = vcvt.s32.f32 %v1265
        %v1274 = vcvt.s32.f32 %v1266
        %v1275 = vcvt.s32.f32 %v1267
        %v1276 = vcvt.s32.f32 %v1268
        %v1277 = vpack.c.bf16 %v1270, %v1269
        %v1278 = vpack.c.bf16 %v1272, %v1271
        %v1279 = vpack.c.bf16 %v1274, %v1273
        %v1280 = vpack.c.bf16 %v1276, %v1275
        %v1285 = vunpack.c.l.b16 %v885
        %v1286 = vunpack.c.h.b16 %v885
        %v1287 = vunpack.c.l.b16 %v886
        %v1288 = vunpack.c.h.b16 %v886
        %v1289 = vunpack.c.l.b16 %v887
        %v1290 = vunpack.c.h.b16 %v887
        %v1291 = vunpack.c.l.b16 %v888
        %v1292 = vunpack.c.h.b16 %v888
        %v1293 = vpack.c.b16 %v1287, %v1285
        %v1294 = vpack.c.b16 %v1288, %v1286
        %v1295 = vpack.c.b16 %v1291, %v1289
        %v1296 = vpack.c.b16 %v1292, %v1290
        %v1305 = vunpack.c.l.b16 %v941
        %v1306 = vunpack.c.h.b16 %v941
        %v1307 = vunpack.c.l.b16 %v942
        %v1308 = vunpack.c.h.b16 %v942
        %v1309 = vunpack.c.l.b16 %v943
        %v1310 = vunpack.c.h.b16 %v943
        %v1311 = vunpack.c.l.b16 %v944
        %v1312 = vunpack.c.h.b16 %v944
        %v1313 = vpack.c.b16 %v1307, %v1305
        %v1314 = vpack.c.b16 %v1308, %v1306
        %v1315 = vpack.c.b16 %v1311, %v1309
        %v1316 = vpack.c.b16 %v1312, %v1310
        %v1325 = vunpack.c.l.b16 %v997
        %v1326 = vunpack.c.h.b16 %v997
        %v1327 = vunpack.c.l.b16 %v998
        %v1328 = vunpack.c.h.b16 %v998
        %v1329 = vunpack.c.l.b16 %v999
        %v1330 = vunpack.c.h.b16 %v999
        %v1331 = vunpack.c.l.b16 %v1000
        %v1332 = vunpack.c.h.b16 %v1000
        %v1333 = vpack.c.b16 %v1327, %v1325
        %v1334 = vpack.c.b16 %v1328, %v1326
        %v1335 = vpack.c.b16 %v1331, %v1329
        %v1336 = vpack.c.b16 %v1332, %v1330
        %v1345 = vunpack.c.l.b16 %v1053
        %v1346 = vunpack.c.h.b16 %v1053
        %v1347 = vunpack.c.l.b16 %v1054
        %v1348 = vunpack.c.h.b16 %v1054
        %v1349 = vunpack.c.l.b16 %v1055
        %v1350 = vunpack.c.h.b16 %v1055
        %v1351 = vunpack.c.l.b16 %v1056
        %v1352 = vunpack.c.h.b16 %v1056
        %v1353 = vpack.c.b16 %v1347, %v1345
        %v1354 = vpack.c.b16 %v1348, %v1346
        %v1355 = vpack.c.b16 %v1351, %v1349
        %v1356 = vpack.c.b16 %v1352, %v1350
        %v1365 = vunpack.c.l.b16 %v1109
        %v1366 = vunpack.c.h.b16 %v1109
        %v1367 = vunpack.c.l.b16 %v1110
        %v1368 = vunpack.c.h.b16 %v1110
        %v1369 = vunpack.c.l.b16 %v1111
        %v1370 = vunpack.c.h.b16 %v1111
        %v1371 = vunpack.c.l.b16 %v1112
        %v1372 = vunpack.c.h.b16 %v1112
        %v1373 = vpack.c.b16 %v1367, %v1365
        %v1374 = vpack.c.b16 %v1368, %v1366
        %v1375 = vpack.c.b16 %v1371, %v1369
        %v1376 = vpack.c.b16 %v1372, %v1370
        %v1385 = vunpack.c.l.b16 %v1165
        %v1386 = vunpack.c.h.b16 %v1165
        %v1387 = vunpack.c.l.b16 %v1166
        %v1388 = vunpack.c.h.b16 %v1166
        %v1389 = vunpack.c.l.b16 %v1167
        %v1390 = vunpack.c.h.b16 %v1167
        %v1391 = vunpack.c.l.b16 %v1168
        %v1392 = vunpack.c.h.b16 %v1168
        %v1393 = vpack.c.b16 %v1387, %v1385
        %v1394 = vpack.c.b16 %v1388, %v1386
        %v1395 = vpack.c.b16 %v1391, %v1389
        %v1396 = vpack.c.b16 %v1392, %v1390
        %v1405 = vunpack.c.l.b16 %v1221
        %v1406 = vunpack.c.h.b16 %v1221
        %v1407 = vunpack.c.l.b16 %v1222
        %v1408 = vunpack.c.h.b16 %v1222
        %v1409 = vunpack.c.l.b16 %v1223
        %v1410 = vunpack.c.h.b16 %v1223
        %v1411 = vunpack.c.l.b16 %v1224
        %v1412 = vunpack.c.h.b16 %v1224
        %v1413 = vpack.c.b16 %v1407, %v1405
        %v1414 = vpack.c.b16 %v1408, %v1406
        %v1415 = vpack.c.b16 %v1411, %v1409
        %v1416 = vpack.c.b16 %v1412, %v1410
        %v1425 = vunpack.c.l.b16 %v1277
        %v1426 = vunpack.c.h.b16 %v1277
        %v1427 = vunpack.c.l.b16 %v1278
        %v1428 = vunpack.c.h.b16 %v1278
        %v1429 = vunpack.c.l.b16 %v1279
        %v1430 = vunpack.c.h.b16 %v1279
        %v1431 = vunpack.c.l.b16 %v1280
        %v1432 = vunpack.c.h.b16 %v1280
        %v1433 = vpack.c.b16 %v1427, %v1425
        %v1434 = vpack.c.b16 %v1428, %v1426
        %v1435 = vpack.c.b16 %v1431, %v1429
        %v1436 = vpack.c.b16 %v1432, %v1430
        %1441 = vmatpush.bf16.msra.mxu0 %v852
        %1442 = vmatpush.bf16.msra.mxu0 %v851
        %1443 = vmatpush.bf16.msra.mxu0 %v850
        %1444 = vmatpush.bf16.msra.mxu0 %v849
        %1445 = vmatpush.bf16.msra.mxu0 %v848
        %1446 = vmatpush.bf16.msra.mxu0 %v847
        %1447 = vmatpush.bf16.msra.mxu0 %v846
        %1448 = vmatpush.bf16.msra.mxu0 %v845
        %1449 = vmatmul.bf16.gmra.mxu0 %v1293
        %v1450 = vpop.f32.mrf.mxu0
        %v1451 = vadd.f32 0.0, %v1450
        %v1452 = vpop.f32.mrf.mxu0
        %v1453 = vadd.f32 0.0, %v1452
        %1454 = vmatmul.bf16.gmra.mxu0 %v1295
        %v1455 = vpop.f32.mrf.mxu0
        %v1456 = vadd.f32 0.0, %v1455
        %v1457 = vpop.f32.mrf.mxu0
        %v1458 = vadd.f32 0.0, %v1457
        %1459 = vmatmul.bf16.gmra.mxu0 %v1313
        %v1460 = vpop.f32.mrf.mxu0
        %v1461 = vadd.f32 0.0, %v1460
        %v1462 = vpop.f32.mrf.mxu0
        %v1463 = vadd.f32 0.0, %v1462
        %1464 = vmatmul.bf16.gmra.mxu0 %v1315
        %v1465 = vpop.f32.mrf.mxu0
        %v1466 = vadd.f32 0.0, %v1465
        %v1467 = vpop.f32.mrf.mxu0
        %v1468 = vadd.f32 0.0, %v1467
        %1469 = vmatmul.bf16.gmra.mxu0 %v1333
        %v1470 = vpop.f32.mrf.mxu0
        %v1471 = vadd.f32 0.0, %v1470
        %v1472 = vpop.f32.mrf.mxu0
        %v1473 = vadd.f32 0.0, %v1472
        %1474 = vmatmul.bf16.gmra.mxu0 %v1335
        %v1475 = vpop.f32.mrf.mxu0
        %v1476 = vadd.f32 0.0, %v1475
        %v1477 = vpop.f32.mrf.mxu0
        %v1478 = vadd.f32 0.0, %v1477
        %1479 = vmatmul.bf16.gmra.mxu0 %v1353
        %v1480 = vpop.f32.mrf.mxu0
        %v1481 = vadd.f32 0.0, %v1480
        %v1482 = vpop.f32.mrf.mxu0
        %v1483 = vadd.f32 0.0, %v1482
        %1484 = vmatmul.bf16.gmra.mxu0 %v1355
        %v1485 = vpop.f32.mrf.mxu0
        %v1486 = vadd.f32 0.0, %v1485
        %v1487 = vpop.f32.mrf.mxu0
        %v1488 = vadd.f32 0.0, %v1487
        %1489 = vmatmul.bf16.gmra.mxu0 %v1373
        %v1490 = vpop.f32.mrf.mxu0
        %v1491 = vadd.f32 0.0, %v1490
        %v1492 = vpop.f32.mrf.mxu0
        %v1493 = vadd.f32 0.0, %v1492
        %1494 = vmatmul.bf16.gmra.mxu0 %v1375
        %v1495 = vpop.f32.mrf.mxu0
        %v1496 = vadd.f32 0.0, %v1495
        %v1497 = vpop.f32.mrf.mxu0
        %v1498 = vadd.f32 0.0, %v1497
        %1499 = vmatmul.bf16.gmra.mxu0 %v1393
        %v1500 = vpop.f32.mrf.mxu0
        %v1501 = vadd.f32 0.0, %v1500
        %v1502 = vpop.f32.mrf.mxu0
        %v1503 = vadd.f32 0.0, %v1502
        %1504 = vmatmul.bf16.gmra.mxu0 %v1395
        %v1505 = vpop.f32.mrf.mxu0
        %v1506 = vadd.f32 0.0, %v1505
        %v1507 = vpop.f32.mrf.mxu0
        %v1508 = vadd.f32 0.0, %v1507
        %1509 = vmatmul.bf16.gmra.mxu0 %v1413
        %v1510 = vpop.f32.mrf.mxu0
        %v1511 = vadd.f32 0.0, %v1510
        %v1512 = vpop.f32.mrf.mxu0
        %v1513 = vadd.f32 0.0, %v1512
        %1514 = vmatmul.bf16.gmra.mxu0 %v1415
        %v1515 = vpop.f32.mrf.mxu0
        %v1516 = vadd.f32 0.0, %v1515
        %v1517 = vpop.f32.mrf.mxu0
        %v1518 = vadd.f32 0.0, %v1517
        %1519 = vmatmul.bf16.gmra.mxu0 %v1433
        %v1520 = vpop.f32.mrf.mxu0
        %v1521 = vadd.f32 0.0, %v1520
        %v1522 = vpop.f32.mrf.mxu0
        %v1523 = vadd.f32 0.0, %v1522
        %1524 = vmatmul.bf16.gmra.mxu0 %v1435
        %v1525 = vpop.f32.mrf.mxu0
        %v1526 = vadd.f32 0.0, %v1525
        %v1527 = vpop.f32.mrf.mxu0
        %v1528 = vadd.f32 0.0, %v1527
        %1529 = vdwg.mxu0
        %1530 = vmatpush.bf16.msra.mxu0 %v860
        %1531 = vmatpush.bf16.msra.mxu0 %v859
        %1532 = vmatpush.bf16.msra.mxu0 %v858
        %1533 = vmatpush.bf16.msra.mxu0 %v857
        %1534 = vmatpush.bf16.msra.mxu0 %v856
        %1535 = vmatpush.bf16.msra.mxu0 %v855
        %1536 = vmatpush.bf16.msra.mxu0 %v854
        %1537 = vmatpush.bf16.msra.mxu0 %v853
        %1538 = vmatmul.bf16.gmra.mxu0 %v1294
        %v1539 = vpop.f32.mrf.mxu0
        %v1540 = vadd.f32 %v1451, %v1539
        %v1541 = vpop.f32.mrf.mxu0
        %v1542 = vadd.f32 %v1453, %v1541
        %1543 = vmatmul.bf16.gmra.mxu0 %v1296
        %v1544 = vpop.f32.mrf.mxu0
        %v1545 = vadd.f32 %v1456, %v1544
        %v1546 = vpop.f32.mrf.mxu0
        %v1547 = vadd.f32 %v1458, %v1546
        %1548 = vmatmul.bf16.gmra.mxu0 %v1314
        %v1549 = vpop.f32.mrf.mxu0
        %v1550 = vadd.f32 %v1461, %v1549
        %v1551 = vpop.f32.mrf.mxu0
        %v1552 = vadd.f32 %v1463, %v1551
        %1553 = vmatmul.bf16.gmra.mxu0 %v1316
        %v1554 = vpop.f32.mrf.mxu0
        %v1555 = vadd.f32 %v1466, %v1554
        %v1556 = vpop.f32.mrf.mxu0
        %v1557 = vadd.f32 %v1468, %v1556
        %1558 = vmatmul.bf16.gmra.mxu0 %v1334
        %v1559 = vpop.f32.mrf.mxu0
        %v1560 = vadd.f32 %v1471, %v1559
        %v1561 = vpop.f32.mrf.mxu0
        %v1562 = vadd.f32 %v1473, %v1561
        %1563 = vmatmul.bf16.gmra.mxu0 %v1336
        %v1564 = vpop.f32.mrf.mxu0
        %v1565 = vadd.f32 %v1476, %v1564
        %v1566 = vpop.f32.mrf.mxu0
        %v1567 = vadd.f32 %v1478, %v1566
        %1568 = vmatmul.bf16.gmra.mxu0 %v1354
        %v1569 = vpop.f32.mrf.mxu0
        %v1570 = vadd.f32 %v1481, %v1569
        %v1571 = vpop.f32.mrf.mxu0
        %v1572 = vadd.f32 %v1483, %v1571
        %1573 = vmatmul.bf16.gmra.mxu0 %v1356
        %v1574 = vpop.f32.mrf.mxu0
        %v1575 = vadd.f32 %v1486, %v1574
        %v1576 = vpop.f32.mrf.mxu0
        %v1577 = vadd.f32 %v1488, %v1576
        %1578 = vmatmul.bf16.gmra.mxu0 %v1374
        %v1579 = vpop.f32.mrf.mxu0
        %v1580 = vadd.f32 %v1491, %v1579
        %v1581 = vpop.f32.mrf.mxu0
        %v1582 = vadd.f32 %v1493, %v1581
        %1583 = vmatmul.bf16.gmra.mxu0 %v1376
        %v1584 = vpop.f32.mrf.mxu0
        %v1585 = vadd.f32 %v1496, %v1584
        %v1586 = vpop.f32.mrf.mxu0
        %v1587 = vadd.f32 %v1498, %v1586
        %1588 = vmatmul.bf16.gmra.mxu0 %v1394
        %v1589 = vpop.f32.mrf.mxu0
        %v1590 = vadd.f32 %v1501, %v1589
        %v1591 = vpop.f32.mrf.mxu0
        %v1592 = vadd.f32 %v1503, %v1591
        %1593 = vmatmul.bf16.gmra.mxu0 %v1396
        %v1594 = vpop.f32.mrf.mxu0
        %v1595 = vadd.f32 %v1506, %v1594
        %v1596 = vpop.f32.mrf.mxu0
        %v1597 = vadd.f32 %v1508, %v1596
        %1598 = vmatmul.bf16.gmra.mxu0 %v1414
        %v1599 = vpop.f32.mrf.mxu0
        %v1600 = vadd.f32 %v1511, %v1599
        %v1601 = vpop.f32.mrf.mxu0
        %v1602 = vadd.f32 %v1513, %v1601
        %1603 = vmatmul.bf16.gmra.mxu0 %v1416
        %v1604 = vpop.f32.mrf.mxu0
        %v1605 = vadd.f32 %v1516, %v1604
        %v1606 = vpop.f32.mrf.mxu0
        %v1607 = vadd.f32 %v1518, %v1606
        %1608 = vmatmul.bf16.gmra.mxu0 %v1434
        %v1609 = vpop.f32.mrf.mxu0
        %v1610 = vadd.f32 %v1521, %v1609
        %v1611 = vpop.f32.mrf.mxu0
        %v1612 = vadd.f32 %v1523, %v1611
        %1613 = vmatmul.bf16.gmra.mxu0 %v1436
        %v1614 = vpop.f32.mrf.mxu0
        %v1615 = vadd.f32 %v1526, %v1614
        %v1616 = vpop.f32.mrf.mxu0
        %v1617 = vadd.f32 %v1528, %v1616
        %1618 = vdwg.mxu0
        %v1651 = vunpack.c.l.b16 %v749
        %v1652 = vunpack.c.l.b16 %v750
        %v1653 = vunpack.c.l.b16 %v751
        %v1654 = vunpack.c.l.b16 %v752
        %v1655 = vunpack.c.l.b16 %v753
        %v1656 = vunpack.c.l.b16 %v754
        %v1657 = vunpack.c.l.b16 %v755
        %v1658 = vunpack.c.l.b16 %v756
        %v1659 = vunpack.c.l.b16 %v757
        %v1660 = vunpack.c.l.b16 %v758
        %v1661 = vunpack.c.l.b16 %v759
        %v1662 = vunpack.c.l.b16 %v760
        %v1663 = vunpack.c.l.b16 %v761
        %v1664 = vunpack.c.l.b16 %v762
        %v1665 = vunpack.c.l.b16 %v763
        %v1666 = vunpack.c.l.b16 %v764
        %v1667 = vunpack.c.l.b16 %v765
        %v1668 = vunpack.c.l.b16 %v766
        %v1669 = vunpack.c.l.b16 %v767
        %v1670 = vunpack.c.l.b16 %v768
        %v1671 = vunpack.c.l.b16 %v769
        %v1672 = vunpack.c.l.b16 %v770
        %v1673 = vunpack.c.l.b16 %v771
        %v1674 = vunpack.c.l.b16 %v772
        %v1675 = vunpack.c.l.b16 %v773
        %v1676 = vunpack.c.l.b16 %v774
        %v1677 = vunpack.c.l.b16 %v775
        %v1678 = vunpack.c.l.b16 %v776
        %v1679 = vunpack.c.l.b16 %v777
        %v1680 = vunpack.c.l.b16 %v778
        %v1681 = vunpack.c.l.b16 %v779
        %v1682 = vunpack.c.l.b16 %v780
        %v1683 = vpack.c.b16 %v1652, %v1651
        %v1684 = vpack.c.b16 %v1654, %v1653
        %v1685 = vpack.c.b16 %v1656, %v1655
        %v1686 = vpack.c.b16 %v1658, %v1657
        %v1687 = vpack.c.b16 %v1660, %v1659
        %v1688 = vpack.c.b16 %v1662, %v1661
        %v1689 = vpack.c.b16 %v1664, %v1663
        %v1690 = vpack.c.b16 %v1666, %v1665
        %v1691 = vpack.c.b16 %v1668, %v1667
        %v1692 = vpack.c.b16 %v1670, %v1669
        %v1693 = vpack.c.b16 %v1672, %v1671
        %v1694 = vpack.c.b16 %v1674, %v1673
        %v1695 = vpack.c.b16 %v1676, %v1675
        %v1696 = vpack.c.b16 %v1678, %v1677
        %v1697 = vpack.c.b16 %v1680, %v1679
        %v1698 = vpack.c.b16 %v1682, %v1681
        %1715 = vmatpush.bf16.msra.mxu0 %v1690
        %1716 = vmatpush.bf16.msra.mxu0 %v1689
        %1717 = vmatpush.bf16.msra.mxu0 %v1688
        %1718 = vmatpush.bf16.msra.mxu0 %v1687
        %1719 = vmatpush.bf16.msra.mxu0 %v1686
        %1720 = vmatpush.bf16.msra.mxu0 %v1685
        %1721 = vmatpush.bf16.msra.mxu0 %v1684
        %1722 = vmatpush.bf16.msra.mxu0 %v1683
        %1723 = vmatmul.bf16.gmra.mxu0 %v1293
        %v1724 = vpop.f32.mrf.mxu0
        %v1725 = vadd.f32 %v1540, %v1724
        %v1726 = vpop.f32.mrf.mxu0
        %v1727 = vadd.f32 %v1542, %v1726
        %1728 = vmatmul.bf16.gmra.mxu0 %v1295
        %v1729 = vpop.f32.mrf.mxu0
        %v1730 = vadd.f32 %v1545, %v1729
        %v1731 = vpop.f32.mrf.mxu0
        %v1732 = vadd.f32 %v1547, %v1731
        %1733 = vmatmul.bf16.gmra.mxu0 %v1313
        %v1734 = vpop.f32.mrf.mxu0
        %v1735 = vadd.f32 %v1550, %v1734
        %v1736 = vpop.f32.mrf.mxu0
        %v1737 = vadd.f32 %v1552, %v1736
        %1738 = vmatmul.bf16.gmra.mxu0 %v1315
        %v1739 = vpop.f32.mrf.mxu0
        %v1740 = vadd.f32 %v1555, %v1739
        %v1741 = vpop.f32.mrf.mxu0
        %v1742 = vadd.f32 %v1557, %v1741
        %1743 = vmatmul.bf16.gmra.mxu0 %v1333
        %v1744 = vpop.f32.mrf.mxu0
        %v1745 = vadd.f32 %v1560, %v1744
        %v1746 = vpop.f32.mrf.mxu0
        %v1747 = vadd.f32 %v1562, %v1746
        %1748 = vmatmul.bf16.gmra.mxu0 %v1335
        %v1749 = vpop.f32.mrf.mxu0
        %v1750 = vadd.f32 %v1565, %v1749
        %v1751 = vpop.f32.mrf.mxu0
        %v1752 = vadd.f32 %v1567, %v1751
        %1753 = vmatmul.bf16.gmra.mxu0 %v1353
        %v1754 = vpop.f32.mrf.mxu0
        %v1755 = vadd.f32 %v1570, %v1754
        %v1756 = vpop.f32.mrf.mxu0
        %v1757 = vadd.f32 %v1572, %v1756
        %1758 = vmatmul.bf16.gmra.mxu0 %v1355
        %v1759 = vpop.f32.mrf.mxu0
        %v1760 = vadd.f32 %v1575, %v1759
        %v1761 = vpop.f32.mrf.mxu0
        %v1762 = vadd.f32 %v1577, %v1761
        %1763 = vmatmul.bf16.gmra.mxu0 %v1373
        %v1764 = vpop.f32.mrf.mxu0
        %v1765 = vadd.f32 %v1580, %v1764
        %v1766 = vpop.f32.mrf.mxu0
        %v1767 = vadd.f32 %v1582, %v1766
        %1768 = vmatmul.bf16.gmra.mxu0 %v1375
        %v1769 = vpop.f32.mrf.mxu0
        %v1770 = vadd.f32 %v1585, %v1769
        %v1771 = vpop.f32.mrf.mxu0
        %v1772 = vadd.f32 %v1587, %v1771
        %1773 = vmatmul.bf16.gmra.mxu0 %v1393
        %v1774 = vpop.f32.mrf.mxu0
        %v1775 = vadd.f32 %v1590, %v1774
        %v1776 = vpop.f32.mrf.mxu0
        %v1777 = vadd.f32 %v1592, %v1776
        %1778 = vmatmul.bf16.gmra.mxu0 %v1395
        %v1779 = vpop.f32.mrf.mxu0
        %v1780 = vadd.f32 %v1595, %v1779
        %v1781 = vpop.f32.mrf.mxu0
        %v1782 = vadd.f32 %v1597, %v1781
        %1783 = vmatmul.bf16.gmra.mxu0 %v1413
        %v1784 = vpop.f32.mrf.mxu0
        %v1785 = vadd.f32 %v1600, %v1784
        %v1786 = vpop.f32.mrf.mxu0
        %v1787 = vadd.f32 %v1602, %v1786
        %1788 = vmatmul.bf16.gmra.mxu0 %v1415
        %v1789 = vpop.f32.mrf.mxu0
        %v1790 = vadd.f32 %v1605, %v1789
        %v1791 = vpop.f32.mrf.mxu0
        %v1792 = vadd.f32 %v1607, %v1791
        %1793 = vmatmul.bf16.gmra.mxu0 %v1433
        %v1794 = vpop.f32.mrf.mxu0
        %v1795 = vadd.f32 %v1610, %v1794
        %v1796 = vpop.f32.mrf.mxu0
        %v1797 = vadd.f32 %v1612, %v1796
        %1798 = vmatmul.bf16.gmra.mxu0 %v1435
        %v1799 = vpop.f32.mrf.mxu0
        %v1800 = vadd.f32 %v1615, %v1799
        %v1801 = vpop.f32.mrf.mxu0
        %v1802 = vadd.f32 %v1617, %v1801
        %1803 = vdwg.mxu0
        %1804 = vmatpush.bf16.msra.mxu0 %v1698
        %1805 = vmatpush.bf16.msra.mxu0 %v1697
        %1806 = vmatpush.bf16.msra.mxu0 %v1696
        %1807 = vmatpush.bf16.msra.mxu0 %v1695
        %1808 = vmatpush.bf16.msra.mxu0 %v1694
        %1809 = vmatpush.bf16.msra.mxu0 %v1693
        %1810 = vmatpush.bf16.msra.mxu0 %v1692
        %1811 = vmatpush.bf16.msra.mxu0 %v1691
        %1812 = vmatmul.bf16.gmra.mxu0 %v1294
        %v1813 = vpop.f32.mrf.mxu0
        %v1814 = vadd.f32 %v1725, %v1813
        %v1815 = vpop.f32.mrf.mxu0
        %v1816 = vadd.f32 %v1727, %v1815
        %1817 = vmatmul.bf16.gmra.mxu0 %v1296
        %v1818 = vpop.f32.mrf.mxu0
        %v1819 = vadd.f32 %v1730, %v1818
        %v1820 = vpop.f32.mrf.mxu0
        %v1821 = vadd.f32 %v1732, %v1820
        %1822 = vmatmul.bf16.gmra.mxu0 %v1314
        %v1823 = vpop.f32.mrf.mxu0
        %v1824 = vadd.f32 %v1735, %v1823
        %v1825 = vpop.f32.mrf.mxu0
        %v1826 = vadd.f32 %v1737, %v1825
        %1827 = vmatmul.bf16.gmra.mxu0 %v1316
        %v1828 = vpop.f32.mrf.mxu0
        %v1829 = vadd.f32 %v1740, %v1828
        %v1830 = vpop.f32.mrf.mxu0
        %v1831 = vadd.f32 %v1742, %v1830
        %1832 = vmatmul.bf16.gmra.mxu0 %v1334
        %v1833 = vpop.f32.mrf.mxu0
        %v1834 = vadd.f32 %v1745, %v1833
        %v1835 = vpop.f32.mrf.mxu0
        %v1836 = vadd.f32 %v1747, %v1835
        %1837 = vmatmul.bf16.gmra.mxu0 %v1336
        %v1838 = vpop.f32.mrf.mxu0
        %v1839 = vadd.f32 %v1750, %v1838
        %v1840 = vpop.f32.mrf.mxu0
        %v1841 = vadd.f32 %v1752, %v1840
        %1842 = vmatmul.bf16.gmra.mxu0 %v1354
        %v1843 = vpop.f32.mrf.mxu0
        %v1844 = vadd.f32 %v1755, %v1843
        %v1845 = vpop.f32.mrf.mxu0
        %v1846 = vadd.f32 %v1757, %v1845
        %1847 = vmatmul.bf16.gmra.mxu0 %v1356
        %v1848 = vpop.f32.mrf.mxu0
        %v1849 = vadd.f32 %v1760, %v1848
        %v1850 = vpop.f32.mrf.mxu0
        %v1851 = vadd.f32 %v1762, %v1850
        %1852 = vmatmul.bf16.gmra.mxu0 %v1374
        %v1853 = vpop.f32.mrf.mxu0
        %v1854 = vadd.f32 %v1765, %v1853
        %v1855 = vpop.f32.mrf.mxu0
        %v1856 = vadd.f32 %v1767, %v1855
        %1857 = vmatmul.bf16.gmra.mxu0 %v1376
        %v1858 = vpop.f32.mrf.mxu0
        %v1859 = vadd.f32 %v1770, %v1858
        %v1860 = vpop.f32.mrf.mxu0
        %v1861 = vadd.f32 %v1772, %v1860
        %1862 = vmatmul.bf16.gmra.mxu0 %v1394
        %v1863 = vpop.f32.mrf.mxu0
        %v1864 = vadd.f32 %v1775, %v1863
        %v1865 = vpop.f32.mrf.mxu0
        %v1866 = vadd.f32 %v1777, %v1865
        %1867 = vmatmul.bf16.gmra.mxu0 %v1396
        %v1868 = vpop.f32.mrf.mxu0
        %v1869 = vadd.f32 %v1780, %v1868
        %v1870 = vpop.f32.mrf.mxu0
        %v1871 = vadd.f32 %v1782, %v1870
        %1872 = vmatmul.bf16.gmra.mxu0 %v1414
        %v1873 = vpop.f32.mrf.mxu0
        %v1874 = vadd.f32 %v1785, %v1873
        %v1875 = vpop.f32.mrf.mxu0
        %v1876 = vadd.f32 %v1787, %v1875
        %1877 = vmatmul.bf16.gmra.mxu0 %v1416
        %v1878 = vpop.f32.mrf.mxu0
        %v1879 = vadd.f32 %v1790, %v1878
        %v1880 = vpop.f32.mrf.mxu0
        %v1881 = vadd.f32 %v1792, %v1880
        %1882 = vmatmul.bf16.gmra.mxu0 %v1434
        %v1883 = vpop.f32.mrf.mxu0
        %v1884 = vadd.f32 %v1795, %v1883
        %v1885 = vpop.f32.mrf.mxu0
        %v1886 = vadd.f32 %v1797, %v1885
        %1887 = vmatmul.bf16.gmra.mxu0 %v1436
        %v1888 = vpop.f32.mrf.mxu0
        %v1889 = vadd.f32 %v1800, %v1888
        %v1890 = vpop.f32.mrf.mxu0
        %v1891 = vadd.f32 %v1802, %v1890
        %1892 = vdwg.mxu0
        %1897 = vrot.lane.b32.xlu0 %v1824, 32
        %v1898 = vpop.permute.xlu0 %1897
        %1899 = vrot.lane.b32.xlu0 %v1826, 32
        %v1900 = vpop.permute.xlu0 %1899
        %1901 = vrot.lane.b32.xlu0 %v1829, 32
        %v1902 = vpop.permute.xlu0 %1901
        %1903 = vrot.lane.b32.xlu0 %v1831, 32
        %v1904 = vpop.permute.xlu0 %1903
        %1913 = vrot.lane.b32.xlu0 %v1834, 64
        %v1914 = vpop.permute.xlu0 %1913
        %1915 = vrot.lane.b32.xlu0 %v1836, 64
        %v1916 = vpop.permute.xlu0 %1915
        %1917 = vrot.lane.b32.xlu0 %v1839, 64
        %v1918 = vpop.permute.xlu0 %1917
        %1919 = vrot.lane.b32.xlu0 %v1841, 64
        %v1920 = vpop.permute.xlu0 %1919
        %1929 = vrot.lane.b32.xlu0 %v1844, 96
        %v1930 = vpop.permute.xlu0 %1929
        %1931 = vrot.lane.b32.xlu0 %v1846, 96
        %v1932 = vpop.permute.xlu0 %1931
        %1933 = vrot.lane.b32.xlu0 %v1849, 96
        %v1934 = vpop.permute.xlu0 %1933
        %1935 = vrot.lane.b32.xlu0 %v1851, 96
        %v1936 = vpop.permute.xlu0 %1935
        %1945 = vrot.lane.b32.xlu0 %v1864, 32
        %v1946 = vpop.permute.xlu0 %1945
        %1947 = vrot.lane.b32.xlu0 %v1866, 32
        %v1948 = vpop.permute.xlu0 %1947
        %1949 = vrot.lane.b32.xlu0 %v1869, 32
        %v1950 = vpop.permute.xlu0 %1949
        %1951 = vrot.lane.b32.xlu0 %v1871, 32
        %v1952 = vpop.permute.xlu0 %1951
        %1961 = vrot.lane.b32.xlu0 %v1874, 64
        %v1962 = vpop.permute.xlu0 %1961
        %1963 = vrot.lane.b32.xlu0 %v1876, 64
        %v1964 = vpop.permute.xlu0 %1963
        %1965 = vrot.lane.b32.xlu0 %v1879, 64
        %v1966 = vpop.permute.xlu0 %1965
        %1967 = vrot.lane.b32.xlu0 %v1881, 64
        %v1968 = vpop.permute.xlu0 %1967
        %1977 = vrot.lane.b32.xlu0 %v1884, 96
        %v1978 = vpop.permute.xlu0 %1977
        %1979 = vrot.lane.b32.xlu0 %v1886, 96
        %v1980 = vpop.permute.xlu0 %1979
        %1981 = vrot.lane.b32.xlu0 %v1889, 96
        %v1982 = vpop.permute.xlu0 %1981
        %1983 = vrot.lane.b32.xlu0 %v1891, 96
        %v1984 = vpop.permute.xlu0 %1983
        %vm1989 = vcmask 261120
        %v1990 = vsel %vm1989, %v1814, %v1898
        %v1991 = vsel %vm1989, %v1816, %v1900
        %v1992 = vsel %vm1989, %v1819, %v1902
        %v1993 = vsel %vm1989, %v1821, %v1904
        %vm1994 = vcmask 523264
        %v1995 = vsel %vm1994, %v1990, %v1914
        %v1996 = vsel %vm1994, %v1991, %v1916
        %v1997 = vsel %vm1994, %v1992, %v1918
        %v1998 = vsel %vm1994, %v1993, %v1920
        %vm1999 = vcmask 785408
        %v2000 = vsel %vm1999, %v1995, %v1930
        %v2001 = vsel %vm1999, %v1996, %v1932
        %v2002 = vsel %vm1999, %v1997, %v1934
        %v2003 = vsel %vm1999, %v1998, %v1936
        %v2004 = vsel %vm1989, %v1854, %v1946
        %v2005 = vsel %vm1989, %v1856, %v1948
        %v2006 = vsel %vm1989, %v1859, %v1950
        %v2007 = vsel %vm1989, %v1861, %v1952
        %v2008 = vsel %vm1994, %v2004, %v1962
        %v2009 = vsel %vm1994, %v2005, %v1964
        %v2010 = vsel %vm1994, %v2006, %v1966
        %v2011 = vsel %vm1994, %v2007, %v1968
        %v2012 = vsel %vm1999, %v2008, %v1978
        %v2013 = vsel %vm1999, %v2009, %v1980
        %v2014 = vsel %vm1999, %v2010, %v1982
        %v2015 = vsel %vm1999, %v2011, %v1984
        %2016 = vst [vmem:[%s228] sm:$0xff] %v2000
        %2017 = vst [vmem:[%s228 + $0x8] sm:$0xff] %v2012
        %2018 = vst [vmem:[%s228 + $0x10] sm:$0xff] %v2001
        %2019 = vst [vmem:[%s228 + $0x18] sm:$0xff] %v2013
        %2020 = vst [vmem:[%s228 + $0x20] sm:$0xff] %v2002
        %2021 = vst [vmem:[%s228 + $0x28] sm:$0xff] %v2014
        %2022 = vst [vmem:[%s228 + $0x30] sm:$0xff] %v2003
        %2023 = vst [vmem:[%s228 + $0x38] sm:$0xff] %v2015
        %p2024 = scmp.lt.s32.totalorder %s19, 1
        %s2025 = scalar_select %p2024, %s19, 1
        %s2026 = smul.addr %s2025, 4
        %s2027 = smul.addr %s2026, 8
        %s2028 = scalar_lea.vmem %s3, %s2027
        %s2029 = sand.u32 %s131, 1
        %s2030 = scalar_lea.sflag [#allocation4], %s2029
        %s2031 = sand.u32 %s131, 1
        %s2032 = smul.addr %s2031, 64
        %s2033 = scalar_lea.vmem [#allocation3], %s2032
        // Predicated region
        $region40: #{tpu_custom_call.1} parent=31 // pred_check
          %p2034 = pneg %p115
        $region41: #{tpu_custom_call.1} parent=31 // pred_check_branch
          %2036 = sbr.rel (%p2034) target = $region43
        $region42: #{tpu_custom_call.1} parent=31 // pred_region
          _
        $region43: #{tpu_custom_call.1} parent=31 // pred_fallthru
          _
        // Predicated region
        $region44: #{tpu_custom_call.1} parent=31 // pred_check
          %p2037 = pneg %p141
        $region45: #{tpu_custom_call.1} parent=31 // pred_check_branch
          %2039 = sbr.rel (%p2037) target = $region47
        $region46: #{tpu_custom_call.1} parent=31 // pred_region
          %2041 = vsyncadd %s2030, 0
          %s2042 = smul.addr %s19, 8
          %s2043 = smul.addr %s2042, 8
          %s2044 = scalar_lea.hbm %s4, %s2043
          %s2045 = sshll.u32 %s2033, 4
          %s2046 = int_to_ptr.vmem [resolvable:$true] %s2045
          %s2047 = sshll.u32 %s2044, 4
          %s2048 = int_to_ptr.hbm [resolvable:$true] %s2047
          %2053 = dma.vmem_to_hbm [thread:$0]  %s2046, 1024, %s2048, %s2030, 256, 256, 16
        $region47: #{tpu_custom_call.1} parent=31 // pred_fallthru
          _
      $region32: #{tpu_custom_call.1} parent=5 // pred_fallthru
        _
      %p2054 = scmp.le.s32.totalorder 2, %s14
      // Predicated region
      $region48: #{tpu_custom_call.1} parent=5 // pred_check
        %p2055 = pneg %p2054
      $region49: #{tpu_custom_call.1} parent=5 // pred_check_branch
        %2057 = sbr.rel (%p2055) target = $region51
      $region50: #{tpu_custom_call.1} parent=5 // pred_region
        %s2058 = ssub.s32 %s14, 2
        // Predicated region
        $region52: #{tpu_custom_call.1} parent=50 // pred_check
          %p2059 = pneg %p121
        $region53: #{tpu_custom_call.1} parent=50 // pred_check_branch
          %2061 = sbr.rel (%p2059) target = $region55
        $region54: #{tpu_custom_call.1} parent=50 // pred_region
          %p2062 = scmp.lt.s32.totalorder %s20, 1
          %s2063 = scalar_select %p2062, %s20, 1
          %s2064 = smul.addr %s2063, 4
          %s2065 = smul.addr %s2064, 8
          %s2066 = scalar_lea.vmem %s3, %s2065
        $region55: #{tpu_custom_call.1} parent=50 // pred_fallthru
          _
        // Predicated region
        $region56: #{tpu_custom_call.1} parent=50 // pred_check
          %p2067 = pneg %p147
        $region57: #{tpu_custom_call.1} parent=50 // pred_check_branch
          %2069 = sbr.rel (%p2067) target = $region59
        $region58: #{tpu_custom_call.1} parent=50 // pred_region
          %s2070 = sand.u32 %s132, 1
          %s2071 = scalar_lea.sflag [#allocation4], %s2070
          %s2072 = sand.u32 %s132, 1
          %s2073 = smul.addr %s2072, 64
          %s2074 = scalar_lea.vmem [#allocation3], %s2073
          %2076 = dma.done %s2071, 1024
        $region59: #{tpu_custom_call.1} parent=50 // pred_fallthru
          _
      $region51: #{tpu_custom_call.1} parent=5 // pred_fallthru
        _
    $region6: #{tpu_custom_call.1} parent=1 // loop_footer
      %s18 = sadd.s32 1, %s14
    $region7: #{tpu_custom_call.1} parent=1 // loop_footer_branch
      %13 = sbr.rel target = $region3
    $region8: #{tpu_custom_call.1} parent=1 // loop_exit
      _
    %2077 = vsyncpa [#allocation4], 1
    %s2078 = scalar_lea.sflag [#allocation4], 1
    %2079 = vsyncpa %s2078, 1

</llo_original>
